<compile_context>
chip_gen: v6e
topology: v6e:2x2x1
jax: 0.10.0
libtpu: 0.0.40
codegen_flags: <defaults>
</compile_context>

<pallas_src>
import functools

import jax
import jax.numpy as jnp
from jax import lax
from jax.experimental import pallas as pl
from jax.experimental.pallas import tpu as pltpu

D = 128                         # padded hidden feature width (lanes)
SUB = 128                       # in-kernel sub-tile rows (bounds vreg pressure)
MAX_TM = 512                    # max rows per grid step
SLOPE = (0.001 + 0.004) / 2.0   # deterministic rrelu slope (eval mode)


# (in_features, out_features) of the 13 Linear layers, in forward-use order:
# layer_in, h1, h2, h3, h4, h5, encode, h6, h7, h8, h9, h10, decode
def layer_dims(io_num):
    return [
        (io_num, 8), (8, 4), (4, 4), (4, 4), (4, 4), (4, 4),  # in, h1..h5
        (4, 1),                                               # encode
        (1, 4), (4, 4), (4, 4), (4, 4), (4, 4),               # h6..h10
        (4, io_num),                                          # decode
    ]


def _rrelu(x):
    return jnp.where(x >= 0, x, x * SLOPE)


def _round_up(n, m):
    return ((n + m - 1) // m) * m


def _choose_tm(batch):
    """Rows per grid step.

    Goals: (a) amortize per-grid-step pipeline overhead with big tiles,
    (b) keep >=2 balanced grid steps when the batch allows so the "parallel"
    batch axis shards evenly across v7x's 2 TensorCores, (c) keep tiles that are
    a multiple of the 128-row in-kernel sub-tile when they exceed it."""
    b8 = _round_up(batch, 8)
    if b8 <= 8:
        return 8
    half = -(-b8 // 2)                    # split the batch across 2 grid steps
    if half <= SUB:
        return _round_up(half, 8)         # <=128 rows -> single sub-tile
    return min(MAX_TM, _round_up(half, SUB))


def ann_kernel(x_ref, w_in_ref, w_hid_ref, w_dec_ref,
               b_in_ref, b_hid_ref, b_dec_ref, enc_ref, dec_ref):
    # x_ref:     (TM, io_num) f32
    # w_in_ref:  (io_num, D) bf16    b_in_ref:  (1, D) f32
    # w_hid_ref: (11, D, D)  bf16    b_hid_ref: (11, 1, D) f32
    # w_dec_ref: (D, io_num) bf16    b_dec_ref: (1, io_num) f32
    # enc_ref:   (TM, 1) f32         dec_ref:   (TM, io_num) f32
    tm = x_ref.shape[0]
    sub = min(SUB, tm)
    n_sub = tm // sub

    # Hoisted wide loads -- reused by every sub-tile.
    w_in = w_in_ref[...]
    w_dec = w_dec_ref[...]
    b_in = b_in_ref[...]
    b_dec = b_dec_ref[...]

    def lin_hid(h, k):
        # bf16 operands on the MXU, f32 accumulation, f32 bias add.
        return jnp.dot(h.astype(jnp.bfloat16), w_hid_ref[k],
                       preferred_element_type=jnp.float32) + b_hid_ref[k]

    def sub_tile(t, carry):
        r0 = pl.multiple_of(t * sub, 8)
        x = x_ref[pl.ds(r0, sub), :]
        # (x - mean) / std with mean=0, std=1 is an identity -- folded away.
        h = jnp.dot(x.astype(jnp.bfloat16), w_in,
                    preferred_element_type=jnp.float32) + b_in
        h = lin_hid(_rrelu(h), 0)                    # layer_h1(rrelu(layer_in(x)))
        h = h + lin_hid(_rrelu(lin_hid(h, 1)), 2)    # + h3(rrelu(h2(h)))
        h = h + lin_hid(_rrelu(lin_hid(h, 3)), 4)    # + h5(rrelu(h4(h)))
        enc = _rrelu(lin_hid(h, 5))                  # rrelu(encode(h)), lane 0 valid
        h = _rrelu(lin_hid(enc, 6))                  # rrelu(h6(enc))
        h = h + lin_hid(_rrelu(lin_hid(h, 7)), 8)    # + h8(rrelu(h7(h)))
        h = h + lin_hid(_rrelu(lin_hid(h, 9)), 10)   # + h10(rrelu(h9(h)))
        dec = _rrelu(jnp.dot(h.astype(jnp.bfloat16), w_dec,
                             preferred_element_type=jnp.float32) + b_dec)
        enc_ref[pl.ds(r0, sub), :] = enc[:, 0:1]
        dec_ref[pl.ds(r0, sub), :] = dec
        return carry

    lax.fori_loop(0, n_sub, sub_tile, 0, unroll=True)


def init_params(key, io_num):
    """Deterministic PyTorch-style Linear init, padded into MXU-friendly blocks."""
    dims = layer_dims(io_num)
    w_raw, b_raw = [], []
    for fin, fout in dims:
        key, kw, kb = jax.random.split(key, 3)
        bound = 1.0 / (fin ** 0.5)
        w_raw.append(jax.random.uniform(kw, (fin, fout), jnp.float32, -bound, bound))
        b_raw.append(jax.random.uniform(kb, (fout,), jnp.float32, -bound, bound))

    # layer_in: keep the narrow io_num contraction dim (no lane-padded input copy).
    w_in = jnp.zeros((io_num, D), jnp.float32).at[:, :dims[0][1]].set(w_raw[0])
    b_in = jnp.zeros((1, D), jnp.float32).at[0, :dims[0][1]].set(b_raw[0])

    # h1..h5, encode, h6..h10: zero-padded to (D, D).
    w_hid = jnp.zeros((11, D, D), jnp.float32)
    b_hid = jnp.zeros((11, 1, D), jnp.float32)
    for i in range(11):
        fin, fout = dims[1 + i]
        w_hid = w_hid.at[i, :fin, :fout].set(w_raw[1 + i])
        b_hid = b_hid.at[i, 0, :fout].set(b_raw[1 + i])

    # decode: keep the narrow io_num output dim (narrow HBM writeback).
    w_dec = jnp.zeros((D, io_num), jnp.float32).at[:dims[12][0], :].set(w_raw[12])
    b_dec = b_raw[12].reshape(1, io_num)

    # Weights feed the MXU as bf16; biases stay f32 (VPU-side math in f32).
    return dict(w_in=w_in.astype(jnp.bfloat16),
                w_hid=w_hid.astype(jnp.bfloat16),
                w_dec=w_dec.astype(jnp.bfloat16),
                b_in=b_in, b_hid=b_hid, b_dec=b_dec)


@functools.partial(jax.jit, static_argnames=("io_num",))
def ann_forward(x, params, *, io_num):
    batch, feat = x.shape
    assert feat == io_num
    tm = _choose_tm(batch)
    assert tm % min(SUB, tm) == 0
    b_pad = _round_up(batch, tm)
    x = x.astype(jnp.float32)
    if b_pad != batch:
        x = jnp.zeros((b_pad, io_num), jnp.float32).at[:batch].set(x)

    enc_pad, dec_pad = pl.pallas_call(
        ann_kernel,
        out_shape=(
            jax.ShapeDtypeStruct((b_pad, 1), jnp.float32),
            jax.ShapeDtypeStruct((b_pad, io_num), jnp.float32),
        ),
        grid_spec=pltpu.PrefetchScalarGridSpec(
            num_scalar_prefetch=0,
            grid=(b_pad // tm,),
            in_specs=[
                pl.BlockSpec((tm, io_num), lambda i: (i, 0)),
                pl.BlockSpec((io_num, D), lambda i: (0, 0)),
                pl.BlockSpec((11, D, D), lambda i: (0, 0, 0)),
                pl.BlockSpec((D, io_num), lambda i: (0, 0)),
                pl.BlockSpec((1, D), lambda i: (0, 0)),
                pl.BlockSpec((11, 1, D), lambda i: (0, 0, 0)),
                pl.BlockSpec((1, io_num), lambda i: (0, 0)),
            ],
            out_specs=[
                pl.BlockSpec((tm, 1), lambda i: (i, 0)),
                pl.BlockSpec((tm, io_num), lambda i: (i, 0)),
            ],
        ),
        compiler_params=pltpu.CompilerParams(
            dimension_semantics=("parallel",)),
    )(x, params["w_in"], params["w_hid"], params["w_dec"],
      params["b_in"], params["b_hid"], params["b_dec"])

    return enc_pad[:batch], dec_pad[:batch]


def ann_forward_ref(x, params, io_num):
    """Pure-JAX reference with the same padded bf16 params, for validation."""
    w_in, w_hid, w_dec = params["w_in"], params["w_hid"], params["w_dec"]
    b_in, b_hid, b_dec = params["b_in"], params["b_hid"], params["b_dec"]

    def mm(h, w):
        return jnp.dot(h.astype(jnp.bfloat16), w, preferred_element_type=jnp.float32)

    def lin_hid(h, k):
        return mm(h, w_hid[k]) + b_hid[k]

    h = mm(x.astype(jnp.float32), w_in) + b_in
    h = lin_hid(_rrelu(h), 0)
    h = h + lin_hid(_rrelu(lin_hid(h, 1)), 2)
    h = h + lin_hid(_rrelu(lin_hid(h, 3)), 4)
    enc = _rrelu(lin_hid(h, 5))
    h = _rrelu(lin_hid(enc, 6))
    h = h + lin_hid(_rrelu(lin_hid(h, 7)), 8)
    h = h + lin_hid(_rrelu(lin_hid(h, 9)), 10)
    dec = _rrelu(mm(h, w_dec) + b_dec)
    return enc[:, :1], dec


if __name__ == "__main__":
    IO_NUM = 16

    key = jax.random.PRNGKey(0)
    kx, kp, kx2 = jax.random.split(key, 3)
    params = init_params(kp, IO_NUM)

    # Small case: single grid step, single sub-tile (TM=8).
    x_small = jax.random.normal(kx, (8, IO_NUM), jnp.float32)
    enc, dec = ann_forward(x_small, params, io_num=IO_NUM)
    jax.block_until_ready((enc, dec))
    enc_r, dec_r = ann_forward_ref(x_small, params, IO_NUM)
    assert enc.shape == (8, 1) and dec.shape == (8, IO_NUM)
    assert jnp.allclose(enc, enc_r, atol=1e-4, rtol=1e-4)
    assert jnp.allclose(dec, dec_r, atol=1e-4, rtol=1e-4)

    # Larger case: exercises a 2-step balanced "parallel" grid (both v7x TCs),
    # multi-row TM with the unrolled 128-row sub-tile loop, and batch padding.
    x_big = jax.random.normal(kx2, (520, IO_NUM), jnp.float32)
    enc, dec = ann_forward(x_big, params, io_num=IO_NUM)
    jax.block_until_ready((enc, dec))
    enc_r, dec_r = ann_forward_ref(x_big, params, IO_NUM)
    assert enc.shape == (520, 1) and dec.shape == (520, IO_NUM)
    assert jnp.allclose(enc, enc_r, atol=1e-4, rtol=1e-4)
    assert jnp.allclose(dec, dec_r, atol=1e-4, rtol=1e-4)

    print("KERNEL_OK")
</pallas_src>

<mosaic_0001>
module attributes {stable_mosaic.version = 11 : i64} {
  func.func @ann_kernel(%arg0: i32, %arg1: memref<8x16xf32, #tpu.memory_space<vmem>>, %arg2: memref<16x128xbf16, #tpu.memory_space<vmem>>, %arg3: memref<11x128x128xbf16, #tpu.memory_space<vmem>>, %arg4: memref<128x16xbf16, #tpu.memory_space<vmem>>, %arg5: memref<1x128xf32, #tpu.memory_space<vmem>>, %arg6: memref<11x1x128xf32, #tpu.memory_space<vmem>>, %arg7: memref<1x16xf32, #tpu.memory_space<vmem>>, %arg8: memref<8x1xf32, #tpu.memory_space<vmem>>, %arg9: memref<8x16xf32, #tpu.memory_space<vmem>>) attributes {dimension_semantics = [#tpu.dimension_semantics<parallel>], iteration_bounds = array<i64: 1>, scalar_prefetch = 0 : i64, scratch_operands = 0 : i64, tpu.core_type = #tpu.core_type<tc>, window_params = [{transform_indices = @transform_0, window_bounds = array<i64: 8, 16>}, {pipeline_mode = #tpu.pipeline_mode<synchronous>, transform_indices = @transform_1, window_bounds = array<i64: 16, 128>}, {pipeline_mode = #tpu.pipeline_mode<synchronous>, transform_indices = @transform_2, window_bounds = array<i64: 11, 128, 128>}, {pipeline_mode = #tpu.pipeline_mode<synchronous>, transform_indices = @transform_3, window_bounds = array<i64: 128, 16>}, {pipeline_mode = #tpu.pipeline_mode<synchronous>, transform_indices = @transform_4, window_bounds = array<i64: 1, 128>}, {pipeline_mode = #tpu.pipeline_mode<synchronous>, transform_indices = @transform_5, window_bounds = array<i64: 11, 1, 128>}, {pipeline_mode = #tpu.pipeline_mode<synchronous>, transform_indices = @transform_6, window_bounds = array<i64: 1, 16>}, {transform_indices = @transform_7, window_bounds = array<i64: 8, 1>}, {transform_indices = @transform_8, window_bounds = array<i64: 8, 16>}]} {
    %c0 = arith.constant 0 : index
    %c0_0 = arith.constant 0 : index
    %0 = vector.load %arg2[%c0, %c0_0] : memref<16x128xbf16, #tpu.memory_space<vmem>>, vector<16x128xbf16>
    %c0_1 = arith.constant 0 : index
    %c0_2 = arith.constant 0 : index
    %1 = vector.load %arg4[%c0_1, %c0_2] : memref<128x16xbf16, #tpu.memory_space<vmem>>, vector<128x16xbf16>
    %c0_3 = arith.constant 0 : index
    %c0_4 = arith.constant 0 : index
    %2 = vector.load %arg5[%c0_3, %c0_4] : memref<1x128xf32, #tpu.memory_space<vmem>>, vector<1x128xf32>
    %c0_5 = arith.constant 0 : index
    %c0_6 = arith.constant 0 : index
    %3 = vector.load %arg7[%c0_5, %c0_6] : memref<1x16xf32, #tpu.memory_space<vmem>>, vector<1x16xf32>
    %c0_i32 = arith.constant 0 : i32
    %c8_i32 = arith.constant 8 : i32
    %4 = arith.muli %c0_i32, %c8_i32 : i32
    %5 = tpu.assume_multiple %4, 8 : i32
    %6 = arith.index_cast %5 : i32 to index
    %c0_7 = arith.constant 0 : index
    %7 = vector.load %arg1[%6, %c0_7] : memref<8x16xf32, #tpu.memory_space<vmem>>, vector<8x16xf32>
    %8 = arith.truncf %7 : vector<8x16xf32> to vector<8x16xbf16>
    %cst = arith.constant dense<0.000000e+00> : vector<8x128xf32>
    %9 = tpu.matmul %8, %0, %cst {dimension_numbers = #tpu.dot_dimension_numbers<[1], [0], [0], [1], [0, 0, 1, 1], [], []>} : vector<8x16xbf16>, vector<16x128xbf16>, vector<8x128xf32> -> vector<8x128xf32>
    %10 = vector.broadcast %2 : vector<1x128xf32> to vector<8x128xf32>
    %11 = arith.addf %9, %10 : vector<8x128xf32>
    %cst_8 = arith.constant 0.000000e+00 : f32
    %12 = vector.broadcast %cst_8 : f32 to vector<8x128xf32>
    %13 = arith.cmpf oge, %11, %12 : vector<8x128xf32>
    %cst_9 = arith.constant 2.500000e-03 : f32
    %14 = vector.broadcast %cst_9 : f32 to vector<8x128xf32>
    %15 = arith.mulf %11, %14 : vector<8x128xf32>
    %16 = arith.select %13, %11, %15 : vector<8x128xi1>, vector<8x128xf32>
    %17 = arith.truncf %16 : vector<8x128xf32> to vector<8x128xbf16>
    %c0_10 = arith.constant 0 : index
    %c0_11 = arith.constant 0 : index
    %c0_12 = arith.constant 0 : index
    %18 = vector.load %arg3[%c0_10, %c0_11, %c0_12] : memref<11x128x128xbf16, #tpu.memory_space<vmem>>, vector<1x128x128xbf16>
    %19 = vector.shape_cast %18 : vector<1x128x128xbf16> to vector<128x128xbf16>
    %cst_13 = arith.constant dense<0.000000e+00> : vector<8x128xf32>
    %20 = tpu.matmul %17, %19, %cst_13 {dimension_numbers = #tpu.dot_dimension_numbers<[1], [0], [0], [1], [0, 0, 1, 1], [], []>} : vector<8x128xbf16>, vector<128x128xbf16>, vector<8x128xf32> -> vector<8x128xf32>
    %c0_14 = arith.constant 0 : index
    %c0_15 = arith.constant 0 : index
    %c0_16 = arith.constant 0 : index
    %21 = vector.load %arg6[%c0_14, %c0_15, %c0_16] : memref<11x1x128xf32, #tpu.memory_space<vmem>>, vector<1x1x128xf32>
    %22 = vector.shape_cast %21 : vector<1x1x128xf32> to vector<1x128xf32>
    %23 = vector.broadcast %22 : vector<1x128xf32> to vector<8x128xf32>
    %24 = arith.addf %20, %23 : vector<8x128xf32>
    %25 = arith.truncf %24 : vector<8x128xf32> to vector<8x128xbf16>
    %c1 = arith.constant 1 : index
    %c0_17 = arith.constant 0 : index
    %c0_18 = arith.constant 0 : index
    %26 = vector.load %arg3[%c1, %c0_17, %c0_18] : memref<11x128x128xbf16, #tpu.memory_space<vmem>>, vector<1x128x128xbf16>
    %27 = vector.shape_cast %26 : vector<1x128x128xbf16> to vector<128x128xbf16>
    %cst_19 = arith.constant dense<0.000000e+00> : vector<8x128xf32>
    %28 = tpu.matmul %25, %27, %cst_19 {dimension_numbers = #tpu.dot_dimension_numbers<[1], [0], [0], [1], [0, 0, 1, 1], [], []>} : vector<8x128xbf16>, vector<128x128xbf16>, vector<8x128xf32> -> vector<8x128xf32>
    %c1_20 = arith.constant 1 : index
    %c0_21 = arith.constant 0 : index
    %c0_22 = arith.constant 0 : index
    %29 = vector.load %arg6[%c1_20, %c0_21, %c0_22] : memref<11x1x128xf32, #tpu.memory_space<vmem>>, vector<1x1x128xf32>
    %30 = vector.shape_cast %29 : vector<1x1x128xf32> to vector<1x128xf32>
    %31 = vector.broadcast %30 : vector<1x128xf32> to vector<8x128xf32>
    %32 = arith.addf %28, %31 : vector<8x128xf32>
    %cst_23 = arith.constant 0.000000e+00 : f32
    %33 = vector.broadcast %cst_23 : f32 to vector<8x128xf32>
    %34 = arith.cmpf oge, %32, %33 : vector<8x128xf32>
    %cst_24 = arith.constant 2.500000e-03 : f32
    %35 = vector.broadcast %cst_24 : f32 to vector<8x128xf32>
    %36 = arith.mulf %32, %35 : vector<8x128xf32>
    %37 = arith.select %34, %32, %36 : vector<8x128xi1>, vector<8x128xf32>
    %38 = arith.truncf %37 : vector<8x128xf32> to vector<8x128xbf16>
    %c2 = arith.constant 2 : index
    %c0_25 = arith.constant 0 : index
    %c0_26 = arith.constant 0 : index
    %39 = vector.load %arg3[%c2, %c0_25, %c0_26] : memref<11x128x128xbf16, #tpu.memory_space<vmem>>, vector<1x128x128xbf16>
    %40 = vector.shape_cast %39 : vector<1x128x128xbf16> to vector<128x128xbf16>
    %cst_27 = arith.constant dense<0.000000e+00> : vector<8x128xf32>
    %41 = tpu.matmul %38, %40, %cst_27 {dimension_numbers = #tpu.dot_dimension_numbers<[1], [0], [0], [1], [0, 0, 1, 1], [], []>} : vector<8x128xbf16>, vector<128x128xbf16>, vector<8x128xf32> -> vector<8x128xf32>
    %c2_28 = arith.constant 2 : index
    %c0_29 = arith.constant 0 : index
    %c0_30 = arith.constant 0 : index
    %42 = vector.load %arg6[%c2_28, %c0_29, %c0_30] : memref<11x1x128xf32, #tpu.memory_space<vmem>>, vector<1x1x128xf32>
    %43 = vector.shape_cast %42 : vector<1x1x128xf32> to vector<1x128xf32>
    %44 = vector.broadcast %43 : vector<1x128xf32> to vector<8x128xf32>
    %45 = arith.addf %41, %44 : vector<8x128xf32>
    %46 = arith.addf %24, %45 : vector<8x128xf32>
    %47 = arith.truncf %46 : vector<8x128xf32> to vector<8x128xbf16>
    %c3 = arith.constant 3 : index
    %c0_31 = arith.constant 0 : index
    %c0_32 = arith.constant 0 : index
    %48 = vector.load %arg3[%c3, %c0_31, %c0_32] : memref<11x128x128xbf16, #tpu.memory_space<vmem>>, vector<1x128x128xbf16>
    %49 = vector.shape_cast %48 : vector<1x128x128xbf16> to vector<128x128xbf16>
    %cst_33 = arith.constant dense<0.000000e+00> : vector<8x128xf32>
    %50 = tpu.matmul %47, %49, %cst_33 {dimension_numbers = #tpu.dot_dimension_numbers<[1], [0], [0], [1], [0, 0, 1, 1], [], []>} : vector<8x128xbf16>, vector<128x128xbf16>, vector<8x128xf32> -> vector<8x128xf32>
    %c3_34 = arith.constant 3 : index
    %c0_35 = arith.constant 0 : index
    %c0_36 = arith.constant 0 : index
    %51 = vector.load %arg6[%c3_34, %c0_35, %c0_36] : memref<11x1x128xf32, #tpu.memory_space<vmem>>, vector<1x1x128xf32>
    %52 = vector.shape_cast %51 : vector<1x1x128xf32> to vector<1x128xf32>
    %53 = vector.broadcast %52 : vector<1x128xf32> to vector<8x128xf32>
    %54 = arith.addf %50, %53 : vector<8x128xf32>
    %cst_37 = arith.constant 0.000000e+00 : f32
    %55 = vector.broadcast %cst_37 : f32 to vector<8x128xf32>
    %56 = arith.cmpf oge, %54, %55 : vector<8x128xf32>
    %cst_38 = arith.constant 2.500000e-03 : f32
    %57 = vector.broadcast %cst_38 : f32 to vector<8x128xf32>
    %58 = arith.mulf %54, %57 : vector<8x128xf32>
    %59 = arith.select %56, %54, %58 : vector<8x128xi1>, vector<8x128xf32>
    %60 = arith.truncf %59 : vector<8x128xf32> to vector<8x128xbf16>
    %c4 = arith.constant 4 : index
    %c0_39 = arith.constant 0 : index
    %c0_40 = arith.constant 0 : index
    %61 = vector.load %arg3[%c4, %c0_39, %c0_40] : memref<11x128x128xbf16, #tpu.memory_space<vmem>>, vector<1x128x128xbf16>
    %62 = vector.shape_cast %61 : vector<1x128x128xbf16> to vector<128x128xbf16>
    %cst_41 = arith.constant dense<0.000000e+00> : vector<8x128xf32>
    %63 = tpu.matmul %60, %62, %cst_41 {dimension_numbers = #tpu.dot_dimension_numbers<[1], [0], [0], [1], [0, 0, 1, 1], [], []>} : vector<8x128xbf16>, vector<128x128xbf16>, vector<8x128xf32> -> vector<8x128xf32>
    %c4_42 = arith.constant 4 : index
    %c0_43 = arith.constant 0 : index
    %c0_44 = arith.constant 0 : index
    %64 = vector.load %arg6[%c4_42, %c0_43, %c0_44] : memref<11x1x128xf32, #tpu.memory_space<vmem>>, vector<1x1x128xf32>
    %65 = vector.shape_cast %64 : vector<1x1x128xf32> to vector<1x128xf32>
    %66 = vector.broadcast %65 : vector<1x128xf32> to vector<8x128xf32>
    %67 = arith.addf %63, %66 : vector<8x128xf32>
    %68 = arith.addf %46, %67 : vector<8x128xf32>
    %69 = arith.truncf %68 : vector<8x128xf32> to vector<8x128xbf16>
    %c5 = arith.constant 5 : index
    %c0_45 = arith.constant 0 : index
    %c0_46 = arith.constant 0 : index
    %70 = vector.load %arg3[%c5, %c0_45, %c0_46] : memref<11x128x128xbf16, #tpu.memory_space<vmem>>, vector<1x128x128xbf16>
    %71 = vector.shape_cast %70 : vector<1x128x128xbf16> to vector<128x128xbf16>
    %cst_47 = arith.constant dense<0.000000e+00> : vector<8x128xf32>
    %72 = tpu.matmul %69, %71, %cst_47 {dimension_numbers = #tpu.dot_dimension_numbers<[1], [0], [0], [1], [0, 0, 1, 1], [], []>} : vector<8x128xbf16>, vector<128x128xbf16>, vector<8x128xf32> -> vector<8x128xf32>
    %c5_48 = arith.constant 5 : index
    %c0_49 = arith.constant 0 : index
    %c0_50 = arith.constant 0 : index
    %73 = vector.load %arg6[%c5_48, %c0_49, %c0_50] : memref<11x1x128xf32, #tpu.memory_space<vmem>>, vector<1x1x128xf32>
    %74 = vector.shape_cast %73 : vector<1x1x128xf32> to vector<1x128xf32>
    %75 = vector.broadcast %74 : vector<1x128xf32> to vector<8x128xf32>
    %76 = arith.addf %72, %75 : vector<8x128xf32>
    %cst_51 = arith.constant 0.000000e+00 : f32
    %77 = vector.broadcast %cst_51 : f32 to vector<8x128xf32>
    %78 = arith.cmpf oge, %76, %77 : vector<8x128xf32>
    %cst_52 = arith.constant 2.500000e-03 : f32
    %79 = vector.broadcast %cst_52 : f32 to vector<8x128xf32>
    %80 = arith.mulf %76, %79 : vector<8x128xf32>
    %81 = arith.select %78, %76, %80 : vector<8x128xi1>, vector<8x128xf32>
    %82 = arith.truncf %81 : vector<8x128xf32> to vector<8x128xbf16>
    %c6 = arith.constant 6 : index
    %c0_53 = arith.constant 0 : index
    %c0_54 = arith.constant 0 : index
    %83 = vector.load %arg3[%c6, %c0_53, %c0_54] : memref<11x128x128xbf16, #tpu.memory_space<vmem>>, vector<1x128x128xbf16>
    %84 = vector.shape_cast %83 : vector<1x128x128xbf16> to vector<128x128xbf16>
    %cst_55 = arith.constant dense<0.000000e+00> : vector<8x128xf32>
    %85 = tpu.matmul %82, %84, %cst_55 {dimension_numbers = #tpu.dot_dimension_numbers<[1], [0], [0], [1], [0, 0, 1, 1], [], []>} : vector<8x128xbf16>, vector<128x128xbf16>, vector<8x128xf32> -> vector<8x128xf32>
    %c6_56 = arith.constant 6 : index
    %c0_57 = arith.constant 0 : index
    %c0_58 = arith.constant 0 : index
    %86 = vector.load %arg6[%c6_56, %c0_57, %c0_58] : memref<11x1x128xf32, #tpu.memory_space<vmem>>, vector<1x1x128xf32>
    %87 = vector.shape_cast %86 : vector<1x1x128xf32> to vector<1x128xf32>
    %88 = vector.broadcast %87 : vector<1x128xf32> to vector<8x128xf32>
    %89 = arith.addf %85, %88 : vector<8x128xf32>
    %cst_59 = arith.constant 0.000000e+00 : f32
    %90 = vector.broadcast %cst_59 : f32 to vector<8x128xf32>
    %91 = arith.cmpf oge, %89, %90 : vector<8x128xf32>
    %cst_60 = arith.constant 2.500000e-03 : f32
    %92 = vector.broadcast %cst_60 : f32 to vector<8x128xf32>
    %93 = arith.mulf %89, %92 : vector<8x128xf32>
    %94 = arith.select %91, %89, %93 : vector<8x128xi1>, vector<8x128xf32>
    %95 = arith.truncf %94 : vector<8x128xf32> to vector<8x128xbf16>
    %c7 = arith.constant 7 : index
    %c0_61 = arith.constant 0 : index
    %c0_62 = arith.constant 0 : index
    %96 = vector.load %arg3[%c7, %c0_61, %c0_62] : memref<11x128x128xbf16, #tpu.memory_space<vmem>>, vector<1x128x128xbf16>
    %97 = vector.shape_cast %96 : vector<1x128x128xbf16> to vector<128x128xbf16>
    %cst_63 = arith.constant dense<0.000000e+00> : vector<8x128xf32>
    %98 = tpu.matmul %95, %97, %cst_63 {dimension_numbers = #tpu.dot_dimension_numbers<[1], [0], [0], [1], [0, 0, 1, 1], [], []>} : vector<8x128xbf16>, vector<128x128xbf16>, vector<8x128xf32> -> vector<8x128xf32>
    %c7_64 = arith.constant 7 : index
    %c0_65 = arith.constant 0 : index
    %c0_66 = arith.constant 0 : index
    %99 = vector.load %arg6[%c7_64, %c0_65, %c0_66] : memref<11x1x128xf32, #tpu.memory_space<vmem>>, vector<1x1x128xf32>
    %100 = vector.shape_cast %99 : vector<1x1x128xf32> to vector<1x128xf32>
    %101 = vector.broadcast %100 : vector<1x128xf32> to vector<8x128xf32>
    %102 = arith.addf %98, %101 : vector<8x128xf32>
    %cst_67 = arith.constant 0.000000e+00 : f32
    %103 = vector.broadcast %cst_67 : f32 to vector<8x128xf32>
    %104 = arith.cmpf oge, %102, %103 : vector<8x128xf32>
    %cst_68 = arith.constant 2.500000e-03 : f32
    %105 = vector.broadcast %cst_68 : f32 to vector<8x128xf32>
    %106 = arith.mulf %102, %105 : vector<8x128xf32>
    %107 = arith.select %104, %102, %106 : vector<8x128xi1>, vector<8x128xf32>
    %108 = arith.truncf %107 : vector<8x128xf32> to vector<8x128xbf16>
    %c8 = arith.constant 8 : index
    %c0_69 = arith.constant 0 : index
    %c0_70 = arith.constant 0 : index
    %109 = vector.load %arg3[%c8, %c0_69, %c0_70] : memref<11x128x128xbf16, #tpu.memory_space<vmem>>, vector<1x128x128xbf16>
    %110 = vector.shape_cast %109 : vector<1x128x128xbf16> to vector<128x128xbf16>
    %cst_71 = arith.constant dense<0.000000e+00> : vector<8x128xf32>
    %111 = tpu.matmul %108, %110, %cst_71 {dimension_numbers = #tpu.dot_dimension_numbers<[1], [0], [0], [1], [0, 0, 1, 1], [], []>} : vector<8x128xbf16>, vector<128x128xbf16>, vector<8x128xf32> -> vector<8x128xf32>
    %c8_72 = arith.constant 8 : index
    %c0_73 = arith.constant 0 : index
    %c0_74 = arith.constant 0 : index
    %112 = vector.load %arg6[%c8_72, %c0_73, %c0_74] : memref<11x1x128xf32, #tpu.memory_space<vmem>>, vector<1x1x128xf32>
    %113 = vector.shape_cast %112 : vector<1x1x128xf32> to vector<1x128xf32>
    %114 = vector.broadcast %113 : vector<1x128xf32> to vector<8x128xf32>
    %115 = arith.addf %111, %114 : vector<8x128xf32>
    %116 = arith.addf %94, %115 : vector<8x128xf32>
    %117 = arith.truncf %116 : vector<8x128xf32> to vector<8x128xbf16>
    %c9 = arith.constant 9 : index
    %c0_75 = arith.constant 0 : index
    %c0_76 = arith.constant 0 : index
    %118 = vector.load %arg3[%c9, %c0_75, %c0_76] : memref<11x128x128xbf16, #tpu.memory_space<vmem>>, vector<1x128x128xbf16>
    %119 = vector.shape_cast %118 : vector<1x128x128xbf16> to vector<128x128xbf16>
    %cst_77 = arith.constant dense<0.000000e+00> : vector<8x128xf32>
    %120 = tpu.matmul %117, %119, %cst_77 {dimension_numbers = #tpu.dot_dimension_numbers<[1], [0], [0], [1], [0, 0, 1, 1], [], []>} : vector<8x128xbf16>, vector<128x128xbf16>, vector<8x128xf32> -> vector<8x128xf32>
    %c9_78 = arith.constant 9 : index
    %c0_79 = arith.constant 0 : index
    %c0_80 = arith.constant 0 : index
    %121 = vector.load %arg6[%c9_78, %c0_79, %c0_80] : memref<11x1x128xf32, #tpu.memory_space<vmem>>, vector<1x1x128xf32>
    %122 = vector.shape_cast %121 : vector<1x1x128xf32> to vector<1x128xf32>
    %123 = vector.broadcast %122 : vector<1x128xf32> to vector<8x128xf32>
    %124 = arith.addf %120, %123 : vector<8x128xf32>
    %cst_81 = arith.constant 0.000000e+00 : f32
    %125 = vector.broadcast %cst_81 : f32 to vector<8x128xf32>
    %126 = arith.cmpf oge, %124, %125 : vector<8x128xf32>
    %cst_82 = arith.constant 2.500000e-03 : f32
    %127 = vector.broadcast %cst_82 : f32 to vector<8x128xf32>
    %128 = arith.mulf %124, %127 : vector<8x128xf32>
    %129 = arith.select %126, %124, %128 : vector<8x128xi1>, vector<8x128xf32>
    %130 = arith.truncf %129 : vector<8x128xf32> to vector<8x128xbf16>
    %c10 = arith.constant 10 : index
    %c0_83 = arith.constant 0 : index
    %c0_84 = arith.constant 0 : index
    %131 = vector.load %arg3[%c10, %c0_83, %c0_84] : memref<11x128x128xbf16, #tpu.memory_space<vmem>>, vector<1x128x128xbf16>
    %132 = vector.shape_cast %131 : vector<1x128x128xbf16> to vector<128x128xbf16>
    %cst_85 = arith.constant dense<0.000000e+00> : vector<8x128xf32>
    %133 = tpu.matmul %130, %132, %cst_85 {dimension_numbers = #tpu.dot_dimension_numbers<[1], [0], [0], [1], [0, 0, 1, 1], [], []>} : vector<8x128xbf16>, vector<128x128xbf16>, vector<8x128xf32> -> vector<8x128xf32>
    %c10_86 = arith.constant 10 : index
    %c0_87 = arith.constant 0 : index
    %c0_88 = arith.constant 0 : index
    %134 = vector.load %arg6[%c10_86, %c0_87, %c0_88] : memref<11x1x128xf32, #tpu.memory_space<vmem>>, vector<1x1x128xf32>
    %135 = vector.shape_cast %134 : vector<1x1x128xf32> to vector<1x128xf32>
    %136 = vector.broadcast %135 : vector<1x128xf32> to vector<8x128xf32>
    %137 = arith.addf %133, %136 : vector<8x128xf32>
    %138 = arith.addf %116, %137 : vector<8x128xf32>
    %139 = arith.truncf %138 : vector<8x128xf32> to vector<8x128xbf16>
    %cst_89 = arith.constant dense<0.000000e+00> : vector<8x16xf32>
    %140 = tpu.matmul %139, %1, %cst_89 {dimension_numbers = #tpu.dot_dimension_numbers<[1], [0], [0], [1], [0, 0, 1, 1], [], []>} : vector<8x128xbf16>, vector<128x16xbf16>, vector<8x16xf32> -> vector<8x16xf32>
    %141 = vector.broadcast %3 : vector<1x16xf32> to vector<8x16xf32>
    %142 = arith.addf %140, %141 : vector<8x16xf32>
    %cst_90 = arith.constant 0.000000e+00 : f32
    %143 = vector.broadcast %cst_90 : f32 to vector<8x16xf32>
    %144 = arith.cmpf oge, %142, %143 : vector<8x16xf32>
    %cst_91 = arith.constant 2.500000e-03 : f32
    %145 = vector.broadcast %cst_91 : f32 to vector<8x16xf32>
    %146 = arith.mulf %142, %145 : vector<8x16xf32>
    %147 = arith.select %144, %142, %146 : vector<8x16xi1>, vector<8x16xf32>
    %148 = vector.extract_strided_slice %81 {offsets = [0, 0], sizes = [8, 1], strides = [1, 1]} : vector<8x128xf32> to vector<8x1xf32>
    %149 = arith.index_cast %5 : i32 to index
    %c0_92 = arith.constant 0 : index
    %150 = vector.load %arg8[%149, %c0_92] : memref<8x1xf32, #tpu.memory_space<vmem>>, vector<8x1xf32>
    tpu.vector_store %arg8[%149, %c0_92], %148 {strides = array<i32>} : memref<8x1xf32, #tpu.memory_space<vmem>>, vector<8x1xf32>,
    %151 = arith.index_cast %5 : i32 to index
    %c0_93 = arith.constant 0 : index
    %152 = vector.load %arg9[%151, %c0_93] : memref<8x16xf32, #tpu.memory_space<vmem>>, vector<8x16xf32>
    tpu.vector_store %arg9[%151, %c0_93], %147 {strides = array<i32>} : memref<8x16xf32, #tpu.memory_space<vmem>>, vector<8x16xf32>,
    %c1_i32 = arith.constant 1 : i32
    return
  }
  func.func @transform_0(%arg0: i32) -> (i32, i32) {
    %c0_i32 = arith.constant 0 : i32
    %c0_i32_0 = arith.constant 0 : i32
    return %arg0, %c0_i32 : i32, i32
  }
  func.func @transform_1(%arg0: i32) -> (i32, i32) {
    %c0_i32 = arith.constant 0 : i32
    %c0_i32_0 = arith.constant 0 : i32
    %c0_i32_1 = arith.constant 0 : i32
    return %c0_i32, %c0_i32_0 : i32, i32
  }
  func.func @transform_2(%arg0: i32) -> (i32, i32, i32) {
    %c0_i32 = arith.constant 0 : i32
    %c0_i32_0 = arith.constant 0 : i32
    %c0_i32_1 = arith.constant 0 : i32
    %c0_i32_2 = arith.constant 0 : i32
    return %c0_i32, %c0_i32_0, %c0_i32_1 : i32, i32, i32
  }
  func.func @transform_3(%arg0: i32) -> (i32, i32) {
    %c0_i32 = arith.constant 0 : i32
    %c0_i32_0 = arith.constant 0 : i32
    %c0_i32_1 = arith.constant 0 : i32
    return %c0_i32, %c0_i32_0 : i32, i32
  }
  func.func @transform_4(%arg0: i32) -> (i32, i32) {
    %c0_i32 = arith.constant 0 : i32
    %c0_i32_0 = arith.constant 0 : i32
    %c0_i32_1 = arith.constant 0 : i32
    return %c0_i32, %c0_i32_0 : i32, i32
  }
  func.func @transform_5(%arg0: i32) -> (i32, i32, i32) {
    %c0_i32 = arith.constant 0 : i32
    %c0_i32_0 = arith.constant 0 : i32
    %c0_i32_1 = arith.constant 0 : i32
    %c0_i32_2 = arith.constant 0 : i32
    return %c0_i32, %c0_i32_0, %c0_i32_1 : i32, i32, i32
  }
  func.func @transform_6(%arg0: i32) -> (i32, i32) {
    %c0_i32 = arith.constant 0 : i32
    %c0_i32_0 = arith.constant 0 : i32
    %c0_i32_1 = arith.constant 0 : i32
    return %c0_i32, %c0_i32_0 : i32, i32
  }
  func.func @transform_7(%arg0: i32) -> (i32, i32) {
    %c0_i32 = arith.constant 0 : i32
    %c0_i32_0 = arith.constant 0 : i32
    return %arg0, %c0_i32 : i32, i32
  }
  func.func @transform_8(%arg0: i32) -> (i32, i32) {
    %c0_i32 = arith.constant 0 : i32
    %c0_i32_0 = arith.constant 0 : i32
    return %arg0, %c0_i32 : i32, i32
  }
}

</mosaic_0001>

<llo_original>
// kernel: ann_forward.1
$region0: #{ann_forward.1}
  #allocation0 [shape = 'u32[]', space=smem, size = 0x4, offset = 0x4, fixed_abs, tag = 'smem constant byte address 0x4 - core index']
  #allocation1 [shape = 'u32[144,128]{1,0:T(1,128)}', space=vmem, size = 0x12000, scoped, tag = 'internal scratch']
  %s0 = inlined_call_operand.vmem [shape: f32[8,16], index: 0, kind: input, shape index: {}]
  %s1 = inlined_call_operand.vmem [shape: bf16[16,128], index: 1, kind: input, shape index: {}]
  %s2 = inlined_call_operand.hbm [shape: bf16[11,128,128], index: 2, kind: input, shape index: {}]
  %s3 = inlined_call_operand.vmem [shape: bf16[128,16], index: 3, kind: input, shape index: {}]
  %s4 = inlined_call_operand.vmem [shape: f32[1,128], index: 4, kind: input, shape index: {}]
  %s5 = inlined_call_operand.vmem [shape: f32[11,1,128], index: 5, kind: input, shape index: {}]
  %s6 = inlined_call_operand.vmem [shape: f32[1,16], index: 6, kind: input, shape index: {}]
  %s7 = inlined_call_operand.vmem [shape: f32[8,1], index: 7, kind: output, shape index: {0}]
  %s8 = inlined_call_operand.hbm [shape: f32[8,16], index: 8, kind: output, shape index: {1}]
  %9 = xla_tuple %s7, %s8
  %s10 = sld [smem:[#allocation0]]
  $region50: #{ann_forward.1} parent=0
    _
  %s12 = ssub.s32 1, %s10
  %s13 = scalar_select 0, %s12, %s10
  $region1: #{ann_forward.1} parent=0
    #allocation2 [shape = 'u8[360448]{0}', space=vmem, size = 0x58000, scoped, tag = 'input window, operand 2, single buffered']
    #allocation3 [shape = 's32[1]{0}', space=sflag, size = 0x4, scoped, tag = 'scoped memory for ann_forward.1']
    #allocation4 [shape = 's32[1]{0}', space=sflag, size = 0x4, scoped, tag = 'scoped memory for ann_forward.1']
    #allocation5 [shape = 'u8[4096]{0}', space=vmem, size = 0x1000, scoped, tag = 'output window, operand 1, single buffered']
    %14 = vsyncpa [#allocation3], 0
    %15 = vsyncpa [#allocation4], 0
    // Predicated region
    $region2: #{ann_forward.1} parent=1 // pred_check
      _
    $region3: #{ann_forward.1} parent=1 // pred_check_branch
      %17 = sbr.rel (0) target = $region5
    $region4: #{ann_forward.1} parent=1 // pred_region
      _
    $region5: #{ann_forward.1} parent=1 // pred_fallthru
      _
    // Predicated region
    $region6: #{ann_forward.1} parent=1 // pred_check
      _
    $region7: #{ann_forward.1} parent=1 // pred_check_branch
      %19 = sbr.rel (0) target = $region9
    $region8: #{ann_forward.1} parent=1 // pred_region
      _
    $region9: #{ann_forward.1} parent=1 // pred_fallthru
      _
    // Predicated region
    $region10: #{ann_forward.1} parent=1 // pred_check
      _
    $region11: #{ann_forward.1} parent=1 // pred_check_branch
      %21 = sbr.rel (0) target = $region13
    $region12: #{ann_forward.1} parent=1 // pred_region
      %s23 = ssub.s32 11264, 11264
      %24 = vsyncadd [#allocation3], %s23
      %s25 = sshll.u32 [#allocation2], 4
      %s26 = int_to_ptr.vmem [resolvable:$true] %s25
      %31 = dma.hbm_to_vmem [thread:$0]  %s2, 11264, %s26, [#allocation3], 64, 64, 4
    $region13: #{ann_forward.1} parent=1 // pred_fallthru
      _
    // Predicated region
    $region14: #{ann_forward.1} parent=1 // pred_check
      _
    $region15: #{ann_forward.1} parent=1 // pred_check_branch
      %33 = sbr.rel (0) target = $region17
    $region16: #{ann_forward.1} parent=1 // pred_region
      _
    $region17: #{ann_forward.1} parent=1 // pred_fallthru
      _
    // Predicated region
    $region18: #{ann_forward.1} parent=1 // pred_check
      _
    $region19: #{ann_forward.1} parent=1 // pred_check_branch
      %35 = sbr.rel (0) target = $region21
    $region20: #{ann_forward.1} parent=1 // pred_region
      _
    $region21: #{ann_forward.1} parent=1 // pred_fallthru
      _
    // Predicated region
    $region22: #{ann_forward.1} parent=1 // pred_check
      _
    $region23: #{ann_forward.1} parent=1 // pred_check_branch
      %37 = sbr.rel (0) target = $region25
    $region24: #{ann_forward.1} parent=1 // pred_region
      _
    $region25: #{ann_forward.1} parent=1 // pred_fallthru
      _
    // Predicated region
    $region26: #{ann_forward.1} parent=1 // pred_check
      _
    $region27: #{ann_forward.1} parent=1 // pred_check_branch
      %39 = sbr.rel (0) target = $region29
    $region28: #{ann_forward.1} parent=1 // pred_region
      _
    $region29: #{ann_forward.1} parent=1 // pred_fallthru
      _
    // Predicated region
    $region30: #{ann_forward.1} parent=1 // pred_check
      _
    $region31: #{ann_forward.1} parent=1 // pred_check_branch
      %41 = sbr.rel (0) target = $region33
    $region32: #{ann_forward.1} parent=1 // pred_region
      %42 = dma.done [#allocation3], 11264
    $region33: #{ann_forward.1} parent=1 // pred_fallthru
      _
    %v44 = vld [vmem:[%s1] sm:$0xf]
    %v45 = vld [vmem:[%s1 + $0x4] sm:$0xf]
    %v46 = vld [vmem:[%s3] sm:$0xf]
    %v47 = vld [vmem:[%s3 + $0x4] sm:$0xf]
    %v48 = vld [vmem:[%s3 + $0x8] sm:$0xf]
    %v49 = vld [vmem:[%s3 + $0xc] sm:$0xf]
    %v50 = vld [vmem:[%s3 + $0x10] sm:$0xf]
    %v51 = vld [vmem:[%s3 + $0x14] sm:$0xf]
    %v52 = vld [vmem:[%s3 + $0x18] sm:$0xf]
    %v53 = vld [vmem:[%s3 + $0x1c] sm:$0xf]
    %v54 = vld [vmem:[%s3 + $0x20] sm:$0xf]
    %v55 = vld [vmem:[%s3 + $0x24] sm:$0xf]
    %v56 = vld [vmem:[%s3 + $0x28] sm:$0xf]
    %v57 = vld [vmem:[%s3 + $0x2c] sm:$0xf]
    %v58 = vld [vmem:[%s3 + $0x30] sm:$0xf]
    %v59 = vld [vmem:[%s3 + $0x34] sm:$0xf]
    %v60 = vld [vmem:[%s3 + $0x38] sm:$0xf]
    %v61 = vld [vmem:[%s3 + $0x3c] sm:$0xf]
    %v62 = vld [vmem:[%s4] sm:$0x1]
    %v63 = vld [vmem:[%s6] sm:$0x1]
    %v64 = vld [vmem:[%s0] sm:$0xff]
    %v65 = vpack.c.bf16 %v64, %v64
    %v67 = vlaneseq
    %v68 = vshrl.u32 %v67, 7
    %v69 = vsub.s32 0, %v68
    %v70 = vrot.slane %v62, %v69
    %v74 = vunpack.c.l.b16 %v44
    %v75 = vunpack.c.l.b16 %v45
    %v76 = vpack.c.b16 %v75, %v74
    %vm78 = vcmask 130048
    %v80 = vsel %vm78, %v65, 0
    %82 = vmatprep.subr.bf16.mxu0 0
    %83 = vmatpush1.bf16.msra.mxu0 0
    %84 = vmatprep.subr.bf16.mxu0 0
    %85 = vmatpush1.bf16.msra.mxu0 0
    %86 = vmatprep.subr.bf16.mxu0 0
    %87 = vmatpush1.bf16.msra.mxu0 0
    %88 = vmatprep.subr.bf16.mxu0 0
    %89 = vmatpush1.bf16.msra.mxu0 0
    %90 = vmatprep.subr.bf16.mxu0 0
    %91 = vmatpush1.bf16.msra.mxu0 0
    %92 = vmatprep.subr.bf16.mxu0 0
    %93 = vmatpush1.bf16.msra.mxu0 0
    %94 = vmatprep.subr.bf16.mxu0 0
    %95 = vmatpush1.bf16.msra.mxu0 0
    %96 = vmatprep.subr.bf16.mxu0 0
    %97 = vmatpush1.bf16.msra.mxu0 %v76
    %98 = vmatprep.subr.bf16.mxu0 0
    %99 = vmatpush2.bf16.msra.mxu0 0
    %100 = vmatprep.subr.bf16.mxu0 0
    %101 = vmatpush2.bf16.msra.mxu0 0
    %102 = vmatprep.subr.bf16.mxu0 0
    %103 = vmatpush2.bf16.msra.mxu0 0
    %104 = vmatprep.subr.bf16.mxu0 0
    %105 = vmatpush2.bf16.msra.mxu0 0
    %106 = vmatprep.subr.bf16.mxu0 0
    %107 = vmatpush2.bf16.msra.mxu0 0
    %108 = vmatprep.subr.bf16.mxu0 0
    %109 = vmatpush2.bf16.msra.mxu0 0
    %110 = vmatprep.subr.bf16.mxu0 0
    %111 = vmatpush2.bf16.msra.mxu0 0
    %112 = vmatprep.subr.bf16.mxu0 0
    %113 = vmatpush2.bf16.msra.mxu0 0
    %114 = vmatprep.mubr.bf16.mxu0 0
    %115 = vmatmul.mubr.bf16.gmra.mxu0 %v80
    %v116 = vpop.f32.mrf.mxu0
    %v117 = vadd.f32 %v70, %v116
    %v118 = vpop.f32.mrf.mxu0
    %v119 = vpop.f32.mrf.mxu0
    %v120 = vpop.f32.mrf.mxu0
    %121 = vdwg.mxu0
    %vm122 = vcmp.ge.f32.partialorder %v117, 0.0
    %v123 = vmul.f32 %v117, 0.0025
    %v124 = vsel %vm122, %v117, %v123
    %v125 = vpack.c.bf16 %v124, %v124
    %v126 = vld [vmem:[#allocation2] sm:$0xf]
    %v127 = vld [vmem:[#allocation2 + $0x4] sm:$0xf]
    %v128 = vld [vmem:[#allocation2 + $0x8] sm:$0xf]
    %v129 = vld [vmem:[#allocation2 + $0xc] sm:$0xf]
    %v130 = vld [vmem:[#allocation2 + $0x10] sm:$0xf]
    %v131 = vld [vmem:[#allocation2 + $0x14] sm:$0xf]
    %v132 = vld [vmem:[#allocation2 + $0x18] sm:$0xf]
    %v133 = vld [vmem:[#allocation2 + $0x1c] sm:$0xf]
    %v134 = vld [vmem:[#allocation2 + $0x20] sm:$0xf]
    %v135 = vld [vmem:[#allocation2 + $0x24] sm:$0xf]
    %v136 = vld [vmem:[#allocation2 + $0x28] sm:$0xf]
    %v137 = vld [vmem:[#allocation2 + $0x2c] sm:$0xf]
    %v138 = vld [vmem:[#allocation2 + $0x30] sm:$0xf]
    %v139 = vld [vmem:[#allocation2 + $0x34] sm:$0xf]
    %v140 = vld [vmem:[#allocation2 + $0x38] sm:$0xf]
    %v141 = vld [vmem:[#allocation2 + $0x3c] sm:$0xf]
    %v142 = vld [vmem:[%s5] sm:$0x1]
    %v144 = vlaneseq
    %v145 = vshrl.u32 %v144, 7
    %v146 = vsub.s32 0, %v145
    %v147 = vrot.slane %v142, %v146
    %v165 = vunpack.c.l.b16 %v126
    %v166 = vunpack.c.l.b16 %v127
    %v167 = vunpack.c.l.b16 %v128
    %v168 = vunpack.c.l.b16 %v129
    %v169 = vunpack.c.l.b16 %v130
    %v170 = vunpack.c.l.b16 %v131
    %v171 = vunpack.c.l.b16 %v132
    %v172 = vunpack.c.l.b16 %v133
    %v173 = vunpack.c.l.b16 %v134
    %v174 = vunpack.c.l.b16 %v135
    %v175 = vunpack.c.l.b16 %v136
    %v176 = vunpack.c.l.b16 %v137
    %v177 = vunpack.c.l.b16 %v138
    %v178 = vunpack.c.l.b16 %v139
    %v179 = vunpack.c.l.b16 %v140
    %v180 = vunpack.c.l.b16 %v141
    %v181 = vpack.c.b16 %v166, %v165
    %v182 = vpack.c.b16 %v168, %v167
    %v183 = vpack.c.b16 %v170, %v169
    %v184 = vpack.c.b16 %v172, %v171
    %v185 = vpack.c.b16 %v174, %v173
    %v186 = vpack.c.b16 %v176, %v175
    %v187 = vpack.c.b16 %v178, %v177
    %v188 = vpack.c.b16 %v180, %v179
    %197 = vmatprep.subr.bf16.mxu0 0
    %198 = vmatpush1.bf16.msra.mxu0 %v188
    %199 = vmatprep.subr.bf16.mxu0 0
    %200 = vmatpush1.bf16.msra.mxu0 %v187
    %201 = vmatprep.subr.bf16.mxu0 0
    %202 = vmatpush1.bf16.msra.mxu0 %v186
    %203 = vmatprep.subr.bf16.mxu0 0
    %204 = vmatpush1.bf16.msra.mxu0 %v185
    %205 = vmatprep.subr.bf16.mxu0 0
    %206 = vmatpush1.bf16.msra.mxu0 %v184
    %207 = vmatprep.subr.bf16.mxu0 0
    %208 = vmatpush1.bf16.msra.mxu0 %v183
    %209 = vmatprep.subr.bf16.mxu0 0
    %210 = vmatpush1.bf16.msra.mxu0 %v182
    %211 = vmatprep.subr.bf16.mxu0 0
    %212 = vmatpush1.bf16.msra.mxu0 %v181
    %213 = vmatprep.subr.bf16.mxu0 0
    %214 = vmatpush2.bf16.msra.mxu0 0
    %215 = vmatprep.subr.bf16.mxu0 0
    %216 = vmatpush2.bf16.msra.mxu0 0
    %217 = vmatprep.subr.bf16.mxu0 0
    %218 = vmatpush2.bf16.msra.mxu0 0
    %219 = vmatprep.subr.bf16.mxu0 0
    %220 = vmatpush2.bf16.msra.mxu0 0
    %221 = vmatprep.subr.bf16.mxu0 0
    %222 = vmatpush2.bf16.msra.mxu0 0
    %223 = vmatprep.subr.bf16.mxu0 0
    %224 = vmatpush2.bf16.msra.mxu0 0
    %225 = vmatprep.subr.bf16.mxu0 0
    %226 = vmatpush2.bf16.msra.mxu0 0
    %227 = vmatprep.subr.bf16.mxu0 0
    %228 = vmatpush2.bf16.msra.mxu0 0
    %229 = vmatprep.mubr.bf16.mxu0 0
    %230 = vmatmul.mubr.bf16.gmra.mxu0 %v125
    %v231 = vpop.f32.mrf.mxu0
    %v232 = vadd.f32 %v147, %v231
    %v233 = vpop.f32.mrf.mxu0
    %v234 = vpop.f32.mrf.mxu0
    %v235 = vpop.f32.mrf.mxu0
    %236 = vdwg.mxu0
    %v237 = vpack.c.bf16 %v232, %v232
    %s238 = scalar_lea.vmem [#allocation2], 64
    %v239 = vld [vmem:[%s238] sm:$0xf]
    %v240 = vld [vmem:[%s238 + $0x4] sm:$0xf]
    %v241 = vld [vmem:[%s238 + $0x8] sm:$0xf]
    %v242 = vld [vmem:[%s238 + $0xc] sm:$0xf]
    %v243 = vld [vmem:[%s238 + $0x10] sm:$0xf]
    %v244 = vld [vmem:[%s238 + $0x14] sm:$0xf]
    %v245 = vld [vmem:[%s238 + $0x18] sm:$0xf]
    %v246 = vld [vmem:[%s238 + $0x1c] sm:$0xf]
    %v247 = vld [vmem:[%s238 + $0x20] sm:$0xf]
    %v248 = vld [vmem:[%s238 + $0x24] sm:$0xf]
    %v249 = vld [vmem:[%s238 + $0x28] sm:$0xf]
    %v250 = vld [vmem:[%s238 + $0x2c] sm:$0xf]
    %v251 = vld [vmem:[%s238 + $0x30] sm:$0xf]
    %v252 = vld [vmem:[%s238 + $0x34] sm:$0xf]
    %v253 = vld [vmem:[%s238 + $0x38] sm:$0xf]
    %v254 = vld [vmem:[%s238 + $0x3c] sm:$0xf]
    %s255 = scalar_lea.vmem %s5, 1
    %v256 = vld [vmem:[%s255] sm:$0x1]
    %v258 = vlaneseq
    %v259 = vshrl.u32 %v258, 7
    %v260 = vsub.s32 0, %v259
    %v261 = vrot.slane %v256, %v260
    %v279 = vunpack.c.l.b16 %v239
    %v280 = vunpack.c.l.b16 %v240
    %v281 = vunpack.c.l.b16 %v241
    %v282 = vunpack.c.l.b16 %v242
    %v283 = vunpack.c.l.b16 %v243
    %v284 = vunpack.c.l.b16 %v244
    %v285 = vunpack.c.l.b16 %v245
    %v286 = vunpack.c.l.b16 %v246
    %v287 = vunpack.c.l.b16 %v247
    %v288 = vunpack.c.l.b16 %v248
    %v289 = vunpack.c.l.b16 %v249
    %v290 = vunpack.c.l.b16 %v250
    %v291 = vunpack.c.l.b16 %v251
    %v292 = vunpack.c.l.b16 %v252
    %v293 = vunpack.c.l.b16 %v253
    %v294 = vunpack.c.l.b16 %v254
    %v295 = vpack.c.b16 %v280, %v279
    %v296 = vpack.c.b16 %v282, %v281
    %v297 = vpack.c.b16 %v284, %v283
    %v298 = vpack.c.b16 %v286, %v285
    %v299 = vpack.c.b16 %v288, %v287
    %v300 = vpack.c.b16 %v290, %v289
    %v301 = vpack.c.b16 %v292, %v291
    %v302 = vpack.c.b16 %v294, %v293
    %311 = vmatprep.subr.bf16.mxu0 0
    %312 = vmatpush1.bf16.msra.mxu0 %v302
    %313 = vmatprep.subr.bf16.mxu0 0
    %314 = vmatpush1.bf16.msra.mxu0 %v301
    %315 = vmatprep.subr.bf16.mxu0 0
    %316 = vmatpush1.bf16.msra.mxu0 %v300
    %317 = vmatprep.subr.bf16.mxu0 0
    %318 = vmatpush1.bf16.msra.mxu0 %v299
    %319 = vmatprep.subr.bf16.mxu0 0
    %320 = vmatpush1.bf16.msra.mxu0 %v298
    %321 = vmatprep.subr.bf16.mxu0 0
    %322 = vmatpush1.bf16.msra.mxu0 %v297
    %323 = vmatprep.subr.bf16.mxu0 0
    %324 = vmatpush1.bf16.msra.mxu0 %v296
    %325 = vmatprep.subr.bf16.mxu0 0
    %326 = vmatpush1.bf16.msra.mxu0 %v295
    %327 = vmatprep.subr.bf16.mxu0 0
    %328 = vmatpush2.bf16.msra.mxu0 0
    %329 = vmatprep.subr.bf16.mxu0 0
    %330 = vmatpush2.bf16.msra.mxu0 0
    %331 = vmatprep.subr.bf16.mxu0 0
    %332 = vmatpush2.bf16.msra.mxu0 0
    %333 = vmatprep.subr.bf16.mxu0 0
    %334 = vmatpush2.bf16.msra.mxu0 0
    %335 = vmatprep.subr.bf16.mxu0 0
    %336 = vmatpush2.bf16.msra.mxu0 0
    %337 = vmatprep.subr.bf16.mxu0 0
    %338 = vmatpush2.bf16.msra.mxu0 0
    %339 = vmatprep.subr.bf16.mxu0 0
    %340 = vmatpush2.bf16.msra.mxu0 0
    %341 = vmatprep.subr.bf16.mxu0 0
    %342 = vmatpush2.bf16.msra.mxu0 0
    %343 = vmatprep.mubr.bf16.mxu0 0
    %344 = vmatmul.mubr.bf16.gmra.mxu0 %v237
    %v345 = vpop.f32.mrf.mxu0
    %v346 = vadd.f32 %v261, %v345
    %v347 = vpop.f32.mrf.mxu0
    %v348 = vpop.f32.mrf.mxu0
    %v349 = vpop.f32.mrf.mxu0
    %350 = vdwg.mxu0
    %vm351 = vcmp.ge.f32.partialorder %v346, 0.0
    %v352 = vmul.f32 %v346, 0.0025
    %v353 = vsel %vm351, %v346, %v352
    %v354 = vpack.c.bf16 %v353, %v353
    %s355 = scalar_lea.vmem [#allocation2], 128
    %v356 = vld [vmem:[%s355] sm:$0xf]
    %v357 = vld [vmem:[%s355 + $0x4] sm:$0xf]
    %v358 = vld [vmem:[%s355 + $0x8] sm:$0xf]
    %v359 = vld [vmem:[%s355 + $0xc] sm:$0xf]
    %v360 = vld [vmem:[%s355 + $0x10] sm:$0xf]
    %v361 = vld [vmem:[%s355 + $0x14] sm:$0xf]
    %v362 = vld [vmem:[%s355 + $0x18] sm:$0xf]
    %v363 = vld [vmem:[%s355 + $0x1c] sm:$0xf]
    %v364 = vld [vmem:[%s355 + $0x20] sm:$0xf]
    %v365 = vld [vmem:[%s355 + $0x24] sm:$0xf]
    %v366 = vld [vmem:[%s355 + $0x28] sm:$0xf]
    %v367 = vld [vmem:[%s355 + $0x2c] sm:$0xf]
    %v368 = vld [vmem:[%s355 + $0x30] sm:$0xf]
    %v369 = vld [vmem:[%s355 + $0x34] sm:$0xf]
    %v370 = vld [vmem:[%s355 + $0x38] sm:$0xf]
    %v371 = vld [vmem:[%s355 + $0x3c] sm:$0xf]
    %s372 = scalar_lea.vmem %s5, 2
    %v373 = vld [vmem:[%s372] sm:$0x1]
    %v375 = vlaneseq
    %v376 = vshrl.u32 %v375, 7
    %v377 = vsub.s32 0, %v376
    %v378 = vrot.slane %v373, %v377
    %v396 = vunpack.c.l.b16 %v356
    %v397 = vunpack.c.l.b16 %v357
    %v398 = vunpack.c.l.b16 %v358
    %v399 = vunpack.c.l.b16 %v359
    %v400 = vunpack.c.l.b16 %v360
    %v401 = vunpack.c.l.b16 %v361
    %v402 = vunpack.c.l.b16 %v362
    %v403 = vunpack.c.l.b16 %v363
    %v404 = vunpack.c.l.b16 %v364
    %v405 = vunpack.c.l.b16 %v365
    %v406 = vunpack.c.l.b16 %v366
    %v407 = vunpack.c.l.b16 %v367
    %v408 = vunpack.c.l.b16 %v368
    %v409 = vunpack.c.l.b16 %v369
    %v410 = vunpack.c.l.b16 %v370
    %v411 = vunpack.c.l.b16 %v371
    %v412 = vpack.c.b16 %v397, %v396
    %v413 = vpack.c.b16 %v399, %v398
    %v414 = vpack.c.b16 %v401, %v400
    %v415 = vpack.c.b16 %v403, %v402
    %v416 = vpack.c.b16 %v405, %v404
    %v417 = vpack.c.b16 %v407, %v406
    %v418 = vpack.c.b16 %v409, %v408
    %v419 = vpack.c.b16 %v411, %v410
    %428 = vmatprep.subr.bf16.mxu0 0
    %429 = vmatpush1.bf16.msra.mxu0 %v419
    %430 = vmatprep.subr.bf16.mxu0 0
    %431 = vmatpush1.bf16.msra.mxu0 %v418
    %432 = vmatprep.subr.bf16.mxu0 0
    %433 = vmatpush1.bf16.msra.mxu0 %v417
    %434 = vmatprep.subr.bf16.mxu0 0
    %435 = vmatpush1.bf16.msra.mxu0 %v416
    %436 = vmatprep.subr.bf16.mxu0 0
    %437 = vmatpush1.bf16.msra.mxu0 %v415
    %438 = vmatprep.subr.bf16.mxu0 0
    %439 = vmatpush1.bf16.msra.mxu0 %v414
    %440 = vmatprep.subr.bf16.mxu0 0
    %441 = vmatpush1.bf16.msra.mxu0 %v413
    %442 = vmatprep.subr.bf16.mxu0 0
    %443 = vmatpush1.bf16.msra.mxu0 %v412
    %444 = vmatprep.subr.bf16.mxu0 0
    %445 = vmatpush2.bf16.msra.mxu0 0
    %446 = vmatprep.subr.bf16.mxu0 0
    %447 = vmatpush2.bf16.msra.mxu0 0
    %448 = vmatprep.subr.bf16.mxu0 0
    %449 = vmatpush2.bf16.msra.mxu0 0
    %450 = vmatprep.subr.bf16.mxu0 0
    %451 = vmatpush2.bf16.msra.mxu0 0
    %452 = vmatprep.subr.bf16.mxu0 0
    %453 = vmatpush2.bf16.msra.mxu0 0
    %454 = vmatprep.subr.bf16.mxu0 0
    %455 = vmatpush2.bf16.msra.mxu0 0
    %456 = vmatprep.subr.bf16.mxu0 0
    %457 = vmatpush2.bf16.msra.mxu0 0
    %458 = vmatprep.subr.bf16.mxu0 0
    %459 = vmatpush2.bf16.msra.mxu0 0
    %460 = vmatprep.mubr.bf16.mxu0 0
    %461 = vmatmul.mubr.bf16.gmra.mxu0 %v354
    %v462 = vpop.f32.mrf.mxu0
    %v463 = vadd.f32 %v378, %v462
    %v464 = vpop.f32.mrf.mxu0
    %v465 = vpop.f32.mrf.mxu0
    %v466 = vpop.f32.mrf.mxu0
    %467 = vdwg.mxu0
    %v468 = vadd.f32 %v232, %v463
    %v469 = vpack.c.bf16 %v468, %v468
    %s470 = scalar_lea.vmem [#allocation2], 192
    %v471 = vld [vmem:[%s470] sm:$0xf]
    %v472 = vld [vmem:[%s470 + $0x4] sm:$0xf]
    %v473 = vld [vmem:[%s470 + $0x8] sm:$0xf]
    %v474 = vld [vmem:[%s470 + $0xc] sm:$0xf]
    %v475 = vld [vmem:[%s470 + $0x10] sm:$0xf]
    %v476 = vld [vmem:[%s470 + $0x14] sm:$0xf]
    %v477 = vld [vmem:[%s470 + $0x18] sm:$0xf]
    %v478 = vld [vmem:[%s470 + $0x1c] sm:$0xf]
    %v479 = vld [vmem:[%s470 + $0x20] sm:$0xf]
    %v480 = vld [vmem:[%s470 + $0x24] sm:$0xf]
    %v481 = vld [vmem:[%s470 + $0x28] sm:$0xf]
    %v482 = vld [vmem:[%s470 + $0x2c] sm:$0xf]
    %v483 = vld [vmem:[%s470 + $0x30] sm:$0xf]
    %v484 = vld [vmem:[%s470 + $0x34] sm:$0xf]
    %v485 = vld [vmem:[%s470 + $0x38] sm:$0xf]
    %v486 = vld [vmem:[%s470 + $0x3c] sm:$0xf]
    %s487 = scalar_lea.vmem %s5, 3
    %v488 = vld [vmem:[%s487] sm:$0x1]
    %v490 = vlaneseq
    %v491 = vshrl.u32 %v490, 7
    %v492 = vsub.s32 0, %v491
    %v493 = vrot.slane %v488, %v492
    %v511 = vunpack.c.l.b16 %v471
    %v512 = vunpack.c.l.b16 %v472
    %v513 = vunpack.c.l.b16 %v473
    %v514 = vunpack.c.l.b16 %v474
    %v515 = vunpack.c.l.b16 %v475
    %v516 = vunpack.c.l.b16 %v476
    %v517 = vunpack.c.l.b16 %v477
    %v518 = vunpack.c.l.b16 %v478
    %v519 = vunpack.c.l.b16 %v479
    %v520 = vunpack.c.l.b16 %v480
    %v521 = vunpack.c.l.b16 %v481
    %v522 = vunpack.c.l.b16 %v482
    %v523 = vunpack.c.l.b16 %v483
    %v524 = vunpack.c.l.b16 %v484
    %v525 = vunpack.c.l.b16 %v485
    %v526 = vunpack.c.l.b16 %v486
    %v527 = vpack.c.b16 %v512, %v511
    %v528 = vpack.c.b16 %v514, %v513
    %v529 = vpack.c.b16 %v516, %v515
    %v530 = vpack.c.b16 %v518, %v517
    %v531 = vpack.c.b16 %v520, %v519
    %v532 = vpack.c.b16 %v522, %v521
    %v533 = vpack.c.b16 %v524, %v523
    %v534 = vpack.c.b16 %v526, %v525
    %543 = vmatprep.subr.bf16.mxu0 0
    %544 = vmatpush1.bf16.msra.mxu0 %v534
    %545 = vmatprep.subr.bf16.mxu0 0
    %546 = vmatpush1.bf16.msra.mxu0 %v533
    %547 = vmatprep.subr.bf16.mxu0 0
    %548 = vmatpush1.bf16.msra.mxu0 %v532
    %549 = vmatprep.subr.bf16.mxu0 0
    %550 = vmatpush1.bf16.msra.mxu0 %v531
    %551 = vmatprep.subr.bf16.mxu0 0
    %552 = vmatpush1.bf16.msra.mxu0 %v530
    %553 = vmatprep.subr.bf16.mxu0 0
    %554 = vmatpush1.bf16.msra.mxu0 %v529
    %555 = vmatprep.subr.bf16.mxu0 0
    %556 = vmatpush1.bf16.msra.mxu0 %v528
    %557 = vmatprep.subr.bf16.mxu0 0
    %558 = vmatpush1.bf16.msra.mxu0 %v527
    %559 = vmatprep.subr.bf16.mxu0 0
    %560 = vmatpush2.bf16.msra.mxu0 0
    %561 = vmatprep.subr.bf16.mxu0 0
    %562 = vmatpush2.bf16.msra.mxu0 0
    %563 = vmatprep.subr.bf16.mxu0 0
    %564 = vmatpush2.bf16.msra.mxu0 0
    %565 = vmatprep.subr.bf16.mxu0 0
    %566 = vmatpush2.bf16.msra.mxu0 0
    %567 = vmatprep.subr.bf16.mxu0 0
    %568 = vmatpush2.bf16.msra.mxu0 0
    %569 = vmatprep.subr.bf16.mxu0 0
    %570 = vmatpush2.bf16.msra.mxu0 0
    %571 = vmatprep.subr.bf16.mxu0 0
    %572 = vmatpush2.bf16.msra.mxu0 0
    %573 = vmatprep.subr.bf16.mxu0 0
    %574 = vmatpush2.bf16.msra.mxu0 0
    %575 = vmatprep.mubr.bf16.mxu0 0
    %576 = vmatmul.mubr.bf16.gmra.mxu0 %v469
    %v577 = vpop.f32.mrf.mxu0
    %v578 = vadd.f32 %v493, %v577
    %v579 = vpop.f32.mrf.mxu0
    %v580 = vpop.f32.mrf.mxu0
    %v581 = vpop.f32.mrf.mxu0
    %582 = vdwg.mxu0
    %vm583 = vcmp.ge.f32.partialorder %v578, 0.0
    %v584 = vmul.f32 %v578, 0.0025
    %v585 = vsel %vm583, %v578, %v584
    %v586 = vpack.c.bf16 %v585, %v585
    %s587 = scalar_lea.vmem [#allocation2], 256
    %v588 = vld [vmem:[%s587] sm:$0xf]
    %v589 = vld [vmem:[%s587 + $0x4] sm:$0xf]
    %v590 = vld [vmem:[%s587 + $0x8] sm:$0xf]
    %v591 = vld [vmem:[%s587 + $0xc] sm:$0xf]
    %v592 = vld [vmem:[%s587 + $0x10] sm:$0xf]
    %v593 = vld [vmem:[%s587 + $0x14] sm:$0xf]
    %v594 = vld [vmem:[%s587 + $0x18] sm:$0xf]
    %v595 = vld [vmem:[%s587 + $0x1c] sm:$0xf]
    %v596 = vld [vmem:[%s587 + $0x20] sm:$0xf]
    %v597 = vld [vmem:[%s587 + $0x24] sm:$0xf]
    %v598 = vld [vmem:[%s587 + $0x28] sm:$0xf]
    %v599 = vld [vmem:[%s587 + $0x2c] sm:$0xf]
    %v600 = vld [vmem:[%s587 + $0x30] sm:$0xf]
    %v601 = vld [vmem:[%s587 + $0x34] sm:$0xf]
    %v602 = vld [vmem:[%s587 + $0x38] sm:$0xf]
    %v603 = vld [vmem:[%s587 + $0x3c] sm:$0xf]
    %s604 = scalar_lea.vmem %s5, 4
    %v605 = vld [vmem:[%s604] sm:$0x1]
    %v607 = vlaneseq
    %v608 = vshrl.u32 %v607, 7
    %v609 = vsub.s32 0, %v608
    %v610 = vrot.slane %v605, %v609
    %v628 = vunpack.c.l.b16 %v588
    %v629 = vunpack.c.l.b16 %v589
    %v630 = vunpack.c.l.b16 %v590
    %v631 = vunpack.c.l.b16 %v591
    %v632 = vunpack.c.l.b16 %v592
    %v633 = vunpack.c.l.b16 %v593
    %v634 = vunpack.c.l.b16 %v594
    %v635 = vunpack.c.l.b16 %v595
    %v636 = vunpack.c.l.b16 %v596
    %v637 = vunpack.c.l.b16 %v597
    %v638 = vunpack.c.l.b16 %v598
    %v639 = vunpack.c.l.b16 %v599
    %v640 = vunpack.c.l.b16 %v600
    %v641 = vunpack.c.l.b16 %v601
    %v642 = vunpack.c.l.b16 %v602
    %v643 = vunpack.c.l.b16 %v603
    %v644 = vpack.c.b16 %v629, %v628
    %v645 = vpack.c.b16 %v631, %v630
    %v646 = vpack.c.b16 %v633, %v632
    %v647 = vpack.c.b16 %v635, %v634
    %v648 = vpack.c.b16 %v637, %v636
    %v649 = vpack.c.b16 %v639, %v638
    %v650 = vpack.c.b16 %v641, %v640
    %v651 = vpack.c.b16 %v643, %v642
    %660 = vmatprep.subr.bf16.mxu0 0
    %661 = vmatpush1.bf16.msra.mxu0 %v651
    %662 = vmatprep.subr.bf16.mxu0 0
    %663 = vmatpush1.bf16.msra.mxu0 %v650
    %664 = vmatprep.subr.bf16.mxu0 0
    %665 = vmatpush1.bf16.msra.mxu0 %v649
    %666 = vmatprep.subr.bf16.mxu0 0
    %667 = vmatpush1.bf16.msra.mxu0 %v648
    %668 = vmatprep.subr.bf16.mxu0 0
    %669 = vmatpush1.bf16.msra.mxu0 %v647
    %670 = vmatprep.subr.bf16.mxu0 0
    %671 = vmatpush1.bf16.msra.mxu0 %v646
    %672 = vmatprep.subr.bf16.mxu0 0
    %673 = vmatpush1.bf16.msra.mxu0 %v645
    %674 = vmatprep.subr.bf16.mxu0 0
    %675 = vmatpush1.bf16.msra.mxu0 %v644
    %676 = vmatprep.subr.bf16.mxu0 0
    %677 = vmatpush2.bf16.msra.mxu0 0
    %678 = vmatprep.subr.bf16.mxu0 0
    %679 = vmatpush2.bf16.msra.mxu0 0
    %680 = vmatprep.subr.bf16.mxu0 0
    %681 = vmatpush2.bf16.msra.mxu0 0
    %682 = vmatprep.subr.bf16.mxu0 0
    %683 = vmatpush2.bf16.msra.mxu0 0
    %684 = vmatprep.subr.bf16.mxu0 0
    %685 = vmatpush2.bf16.msra.mxu0 0
    %686 = vmatprep.subr.bf16.mxu0 0
    %687 = vmatpush2.bf16.msra.mxu0 0
    %688 = vmatprep.subr.bf16.mxu0 0
    %689 = vmatpush2.bf16.msra.mxu0 0
    %690 = vmatprep.subr.bf16.mxu0 0
    %691 = vmatpush2.bf16.msra.mxu0 0
    %692 = vmatprep.mubr.bf16.mxu0 0
    %693 = vmatmul.mubr.bf16.gmra.mxu0 %v586
    %v694 = vpop.f32.mrf.mxu0
    %v695 = vadd.f32 %v610, %v694
    %v696 = vpop.f32.mrf.mxu0
    %v697 = vpop.f32.mrf.mxu0
    %v698 = vpop.f32.mrf.mxu0
    %699 = vdwg.mxu0
    %v700 = vadd.f32 %v468, %v695
    %v701 = vpack.c.bf16 %v700, %v700
    %s702 = scalar_lea.vmem [#allocation2], 320
    %v703 = vld [vmem:[%s702] sm:$0xf]
    %v704 = vld [vmem:[%s702 + $0x4] sm:$0xf]
    %v705 = vld [vmem:[%s702 + $0x8] sm:$0xf]
    %v706 = vld [vmem:[%s702 + $0xc] sm:$0xf]
    %v707 = vld [vmem:[%s702 + $0x10] sm:$0xf]
    %v708 = vld [vmem:[%s702 + $0x14] sm:$0xf]
    %v709 = vld [vmem:[%s702 + $0x18] sm:$0xf]
    %v710 = vld [vmem:[%s702 + $0x1c] sm:$0xf]
    %v711 = vld [vmem:[%s702 + $0x20] sm:$0xf]
    %v712 = vld [vmem:[%s702 + $0x24] sm:$0xf]
    %v713 = vld [vmem:[%s702 + $0x28] sm:$0xf]
    %v714 = vld [vmem:[%s702 + $0x2c] sm:$0xf]
    %v715 = vld [vmem:[%s702 + $0x30] sm:$0xf]
    %v716 = vld [vmem:[%s702 + $0x34] sm:$0xf]
    %v717 = vld [vmem:[%s702 + $0x38] sm:$0xf]
    %v718 = vld [vmem:[%s702 + $0x3c] sm:$0xf]
    %s719 = scalar_lea.vmem %s5, 5
    %v720 = vld [vmem:[%s719] sm:$0x1]
    %v722 = vlaneseq
    %v723 = vshrl.u32 %v722, 7
    %v724 = vsub.s32 0, %v723
    %v725 = vrot.slane %v720, %v724
    %v743 = vunpack.c.l.b16 %v703
    %v744 = vunpack.c.l.b16 %v704
    %v745 = vunpack.c.l.b16 %v705
    %v746 = vunpack.c.l.b16 %v706
    %v747 = vunpack.c.l.b16 %v707
    %v748 = vunpack.c.l.b16 %v708
    %v749 = vunpack.c.l.b16 %v709
    %v750 = vunpack.c.l.b16 %v710
    %v751 = vunpack.c.l.b16 %v711
    %v752 = vunpack.c.l.b16 %v712
    %v753 = vunpack.c.l.b16 %v713
    %v754 = vunpack.c.l.b16 %v714
    %v755 = vunpack.c.l.b16 %v715
    %v756 = vunpack.c.l.b16 %v716
    %v757 = vunpack.c.l.b16 %v717
    %v758 = vunpack.c.l.b16 %v718
    %v759 = vpack.c.b16 %v744, %v743
    %v760 = vpack.c.b16 %v746, %v745
    %v761 = vpack.c.b16 %v748, %v747
    %v762 = vpack.c.b16 %v750, %v749
    %v763 = vpack.c.b16 %v752, %v751
    %v764 = vpack.c.b16 %v754, %v753
    %v765 = vpack.c.b16 %v756, %v755
    %v766 = vpack.c.b16 %v758, %v757
    %775 = vmatprep.subr.bf16.mxu0 0
    %776 = vmatpush1.bf16.msra.mxu0 %v766
    %777 = vmatprep.subr.bf16.mxu0 0
    %778 = vmatpush1.bf16.msra.mxu0 %v765
    %779 = vmatprep.subr.bf16.mxu0 0
    %780 = vmatpush1.bf16.msra.mxu0 %v764
    %781 = vmatprep.subr.bf16.mxu0 0
    %782 = vmatpush1.bf16.msra.mxu0 %v763
    %783 = vmatprep.subr.bf16.mxu0 0
    %784 = vmatpush1.bf16.msra.mxu0 %v762
    %785 = vmatprep.subr.bf16.mxu0 0
    %786 = vmatpush1.bf16.msra.mxu0 %v761
    %787 = vmatprep.subr.bf16.mxu0 0
    %788 = vmatpush1.bf16.msra.mxu0 %v760
    %789 = vmatprep.subr.bf16.mxu0 0
    %790 = vmatpush1.bf16.msra.mxu0 %v759
    %791 = vmatprep.subr.bf16.mxu0 0
    %792 = vmatpush2.bf16.msra.mxu0 0
    %793 = vmatprep.subr.bf16.mxu0 0
    %794 = vmatpush2.bf16.msra.mxu0 0
    %795 = vmatprep.subr.bf16.mxu0 0
    %796 = vmatpush2.bf16.msra.mxu0 0
    %797 = vmatprep.subr.bf16.mxu0 0
    %798 = vmatpush2.bf16.msra.mxu0 0
    %799 = vmatprep.subr.bf16.mxu0 0
    %800 = vmatpush2.bf16.msra.mxu0 0
    %801 = vmatprep.subr.bf16.mxu0 0
    %802 = vmatpush2.bf16.msra.mxu0 0
    %803 = vmatprep.subr.bf16.mxu0 0
    %804 = vmatpush2.bf16.msra.mxu0 0
    %805 = vmatprep.subr.bf16.mxu0 0
    %806 = vmatpush2.bf16.msra.mxu0 0
    %807 = vmatprep.mubr.bf16.mxu0 0
    %808 = vmatmul.mubr.bf16.gmra.mxu0 %v701
    %v809 = vpop.f32.mrf.mxu0
    %v810 = vadd.f32 %v725, %v809
    %v811 = vpop.f32.mrf.mxu0
    %v812 = vpop.f32.mrf.mxu0
    %v813 = vpop.f32.mrf.mxu0
    %814 = vdwg.mxu0
    %vm815 = vcmp.ge.f32.partialorder %v810, 0.0
    %v816 = vmul.f32 %v810, 0.0025
    %v817 = vsel %vm815, %v810, %v816
    %v818 = vpack.c.bf16 %v817, %v817
    %s819 = scalar_lea.vmem [#allocation2], 384
    %v820 = vld [vmem:[%s819] sm:$0xf]
    %v821 = vld [vmem:[%s819 + $0x4] sm:$0xf]
    %v822 = vld [vmem:[%s819 + $0x8] sm:$0xf]
    %v823 = vld [vmem:[%s819 + $0xc] sm:$0xf]
    %v824 = vld [vmem:[%s819 + $0x10] sm:$0xf]
    %v825 = vld [vmem:[%s819 + $0x14] sm:$0xf]
    %v826 = vld [vmem:[%s819 + $0x18] sm:$0xf]
    %v827 = vld [vmem:[%s819 + $0x1c] sm:$0xf]
    %v828 = vld [vmem:[%s819 + $0x20] sm:$0xf]
    %v829 = vld [vmem:[%s819 + $0x24] sm:$0xf]
    %v830 = vld [vmem:[%s819 + $0x28] sm:$0xf]
    %v831 = vld [vmem:[%s819 + $0x2c] sm:$0xf]
    %v832 = vld [vmem:[%s819 + $0x30] sm:$0xf]
    %v833 = vld [vmem:[%s819 + $0x34] sm:$0xf]
    %v834 = vld [vmem:[%s819 + $0x38] sm:$0xf]
    %v835 = vld [vmem:[%s819 + $0x3c] sm:$0xf]
    %s836 = scalar_lea.vmem %s5, 6
    %v837 = vld [vmem:[%s836] sm:$0x1]
    %v839 = vlaneseq
    %v840 = vshrl.u32 %v839, 7
    %v841 = vsub.s32 0, %v840
    %v842 = vrot.slane %v837, %v841
    %v860 = vunpack.c.l.b16 %v820
    %v861 = vunpack.c.l.b16 %v821
    %v862 = vunpack.c.l.b16 %v822
    %v863 = vunpack.c.l.b16 %v823
    %v864 = vunpack.c.l.b16 %v824
    %v865 = vunpack.c.l.b16 %v825
    %v866 = vunpack.c.l.b16 %v826
    %v867 = vunpack.c.l.b16 %v827
    %v868 = vunpack.c.l.b16 %v828
    %v869 = vunpack.c.l.b16 %v829
    %v870 = vunpack.c.l.b16 %v830
    %v871 = vunpack.c.l.b16 %v831
    %v872 = vunpack.c.l.b16 %v832
    %v873 = vunpack.c.l.b16 %v833
    %v874 = vunpack.c.l.b16 %v834
    %v875 = vunpack.c.l.b16 %v835
    %v876 = vpack.c.b16 %v861, %v860
    %v877 = vpack.c.b16 %v863, %v862
    %v878 = vpack.c.b16 %v865, %v864
    %v879 = vpack.c.b16 %v867, %v866
    %v880 = vpack.c.b16 %v869, %v868
    %v881 = vpack.c.b16 %v871, %v870
    %v882 = vpack.c.b16 %v873, %v872
    %v883 = vpack.c.b16 %v875, %v874
    %892 = vmatprep.subr.bf16.mxu0 0
    %893 = vmatpush1.bf16.msra.mxu0 %v883
    %894 = vmatprep.subr.bf16.mxu0 0
    %895 = vmatpush1.bf16.msra.mxu0 %v882
    %896 = vmatprep.subr.bf16.mxu0 0
    %897 = vmatpush1.bf16.msra.mxu0 %v881
    %898 = vmatprep.subr.bf16.mxu0 0
    %899 = vmatpush1.bf16.msra.mxu0 %v880
    %900 = vmatprep.subr.bf16.mxu0 0
    %901 = vmatpush1.bf16.msra.mxu0 %v879
    %902 = vmatprep.subr.bf16.mxu0 0
    %903 = vmatpush1.bf16.msra.mxu0 %v878
    %904 = vmatprep.subr.bf16.mxu0 0
    %905 = vmatpush1.bf16.msra.mxu0 %v877
    %906 = vmatprep.subr.bf16.mxu0 0
    %907 = vmatpush1.bf16.msra.mxu0 %v876
    %908 = vmatprep.subr.bf16.mxu0 0
    %909 = vmatpush2.bf16.msra.mxu0 0
    %910 = vmatprep.subr.bf16.mxu0 0
    %911 = vmatpush2.bf16.msra.mxu0 0
    %912 = vmatprep.subr.bf16.mxu0 0
    %913 = vmatpush2.bf16.msra.mxu0 0
    %914 = vmatprep.subr.bf16.mxu0 0
    %915 = vmatpush2.bf16.msra.mxu0 0
    %916 = vmatprep.subr.bf16.mxu0 0
    %917 = vmatpush2.bf16.msra.mxu0 0
    %918 = vmatprep.subr.bf16.mxu0 0
    %919 = vmatpush2.bf16.msra.mxu0 0
    %920 = vmatprep.subr.bf16.mxu0 0
    %921 = vmatpush2.bf16.msra.mxu0 0
    %922 = vmatprep.subr.bf16.mxu0 0
    %923 = vmatpush2.bf16.msra.mxu0 0
    %924 = vmatprep.mubr.bf16.mxu0 0
    %925 = vmatmul.mubr.bf16.gmra.mxu0 %v818
    %v926 = vpop.f32.mrf.mxu0
    %v927 = vadd.f32 %v842, %v926
    %v928 = vpop.f32.mrf.mxu0
    %v929 = vpop.f32.mrf.mxu0
    %v930 = vpop.f32.mrf.mxu0
    %931 = vdwg.mxu0
    %vm932 = vcmp.ge.f32.partialorder %v927, 0.0
    %v933 = vmul.f32 %v927, 0.0025
    %v934 = vsel %vm932, %v927, %v933
    %v935 = vpack.c.bf16 %v934, %v934
    %s936 = scalar_lea.vmem [#allocation2], 448
    %v937 = vld [vmem:[%s936] sm:$0xf]
    %v938 = vld [vmem:[%s936 + $0x4] sm:$0xf]
    %v939 = vld [vmem:[%s936 + $0x8] sm:$0xf]
    %v940 = vld [vmem:[%s936 + $0xc] sm:$0xf]
    %v941 = vld [vmem:[%s936 + $0x10] sm:$0xf]
    %v942 = vld [vmem:[%s936 + $0x14] sm:$0xf]
    %v943 = vld [vmem:[%s936 + $0x18] sm:$0xf]
    %v944 = vld [vmem:[%s936 + $0x1c] sm:$0xf]
    %v945 = vld [vmem:[%s936 + $0x20] sm:$0xf]
    %v946 = vld [vmem:[%s936 + $0x24] sm:$0xf]
    %v947 = vld [vmem:[%s936 + $0x28] sm:$0xf]
    %v948 = vld [vmem:[%s936 + $0x2c] sm:$0xf]
    %v949 = vld [vmem:[%s936 + $0x30] sm:$0xf]
    %v950 = vld [vmem:[%s936 + $0x34] sm:$0xf]
    %v951 = vld [vmem:[%s936 + $0x38] sm:$0xf]
    %v952 = vld [vmem:[%s936 + $0x3c] sm:$0xf]
    %s953 = scalar_lea.vmem %s5, 7
    %v954 = vld [vmem:[%s953] sm:$0x1]
    %v956 = vlaneseq
    %v957 = vshrl.u32 %v956, 7
    %v958 = vsub.s32 0, %v957
    %v959 = vrot.slane %v954, %v958
    %v977 = vunpack.c.l.b16 %v937
    %v978 = vunpack.c.l.b16 %v938
    %v979 = vunpack.c.l.b16 %v939
    %v980 = vunpack.c.l.b16 %v940
    %v981 = vunpack.c.l.b16 %v941
    %v982 = vunpack.c.l.b16 %v942
    %v983 = vunpack.c.l.b16 %v943
    %v984 = vunpack.c.l.b16 %v944
    %v985 = vunpack.c.l.b16 %v945
    %v986 = vunpack.c.l.b16 %v946
    %v987 = vunpack.c.l.b16 %v947
    %v988 = vunpack.c.l.b16 %v948
    %v989 = vunpack.c.l.b16 %v949
    %v990 = vunpack.c.l.b16 %v950
    %v991 = vunpack.c.l.b16 %v951
    %v992 = vunpack.c.l.b16 %v952
    %v993 = vpack.c.b16 %v978, %v977
    %v994 = vpack.c.b16 %v980, %v979
    %v995 = vpack.c.b16 %v982, %v981
    %v996 = vpack.c.b16 %v984, %v983
    %v997 = vpack.c.b16 %v986, %v985
    %v998 = vpack.c.b16 %v988, %v987
    %v999 = vpack.c.b16 %v990, %v989
    %v1000 = vpack.c.b16 %v992, %v991
    %1009 = vmatprep.subr.bf16.mxu0 0
    %1010 = vmatpush1.bf16.msra.mxu0 %v1000
    %1011 = vmatprep.subr.bf16.mxu0 0
    %1012 = vmatpush1.bf16.msra.mxu0 %v999
    %1013 = vmatprep.subr.bf16.mxu0 0
    %1014 = vmatpush1.bf16.msra.mxu0 %v998
    %1015 = vmatprep.subr.bf16.mxu0 0
    %1016 = vmatpush1.bf16.msra.mxu0 %v997
    %1017 = vmatprep.subr.bf16.mxu0 0
    %1018 = vmatpush1.bf16.msra.mxu0 %v996
    %1019 = vmatprep.subr.bf16.mxu0 0
    %1020 = vmatpush1.bf16.msra.mxu0 %v995
    %1021 = vmatprep.subr.bf16.mxu0 0
    %1022 = vmatpush1.bf16.msra.mxu0 %v994
    %1023 = vmatprep.subr.bf16.mxu0 0
    %1024 = vmatpush1.bf16.msra.mxu0 %v993
    %1025 = vmatprep.subr.bf16.mxu0 0
    %1026 = vmatpush2.bf16.msra.mxu0 0
    %1027 = vmatprep.subr.bf16.mxu0 0
    %1028 = vmatpush2.bf16.msra.mxu0 0
    %1029 = vmatprep.subr.bf16.mxu0 0
    %1030 = vmatpush2.bf16.msra.mxu0 0
    %1031 = vmatprep.subr.bf16.mxu0 0
    %1032 = vmatpush2.bf16.msra.mxu0 0
    %1033 = vmatprep.subr.bf16.mxu0 0
    %1034 = vmatpush2.bf16.msra.mxu0 0
    %1035 = vmatprep.subr.bf16.mxu0 0
    %1036 = vmatpush2.bf16.msra.mxu0 0
    %1037 = vmatprep.subr.bf16.mxu0 0
    %1038 = vmatpush2.bf16.msra.mxu0 0
    %1039 = vmatprep.subr.bf16.mxu0 0
    %1040 = vmatpush2.bf16.msra.mxu0 0
    %1041 = vmatprep.mubr.bf16.mxu0 0
    %1042 = vmatmul.mubr.bf16.gmra.mxu0 %v935
    %v1043 = vpop.f32.mrf.mxu0
    %v1044 = vadd.f32 %v959, %v1043
    %v1045 = vpop.f32.mrf.mxu0
    %v1046 = vpop.f32.mrf.mxu0
    %v1047 = vpop.f32.mrf.mxu0
    %1048 = vdwg.mxu0
    %vm1049 = vcmp.ge.f32.partialorder %v1044, 0.0
    %v1050 = vmul.f32 %v1044, 0.0025
    %v1051 = vsel %vm1049, %v1044, %v1050
    %v1052 = vpack.c.bf16 %v1051, %v1051
    %s1053 = scalar_lea.vmem [#allocation2], 512
    %v1054 = vld [vmem:[%s1053] sm:$0xf]
    %v1055 = vld [vmem:[%s1053 + $0x4] sm:$0xf]
    %v1056 = vld [vmem:[%s1053 + $0x8] sm:$0xf]
    %v1057 = vld [vmem:[%s1053 + $0xc] sm:$0xf]
    %v1058 = vld [vmem:[%s1053 + $0x10] sm:$0xf]
    %v1059 = vld [vmem:[%s1053 + $0x14] sm:$0xf]
    %v1060 = vld [vmem:[%s1053 + $0x18] sm:$0xf]
    %v1061 = vld [vmem:[%s1053 + $0x1c] sm:$0xf]
    %v1062 = vld [vmem:[%s1053 + $0x20] sm:$0xf]
    %v1063 = vld [vmem:[%s1053 + $0x24] sm:$0xf]
    %v1064 = vld [vmem:[%s1053 + $0x28] sm:$0xf]
    %v1065 = vld [vmem:[%s1053 + $0x2c] sm:$0xf]
    %v1066 = vld [vmem:[%s1053 + $0x30] sm:$0xf]
    %v1067 = vld [vmem:[%s1053 + $0x34] sm:$0xf]
    %v1068 = vld [vmem:[%s1053 + $0x38] sm:$0xf]
    %v1069 = vld [vmem:[%s1053 + $0x3c] sm:$0xf]
    %s1070 = scalar_lea.vmem %s5, 8
    %v1071 = vld [vmem:[%s1070] sm:$0x1]
    %v1073 = vlaneseq
    %v1074 = vshrl.u32 %v1073, 7
    %v1075 = vsub.s32 0, %v1074
    %v1076 = vrot.slane %v1071, %v1075
    %v1094 = vunpack.c.l.b16 %v1054
    %v1095 = vunpack.c.l.b16 %v1055
    %v1096 = vunpack.c.l.b16 %v1056
    %v1097 = vunpack.c.l.b16 %v1057
    %v1098 = vunpack.c.l.b16 %v1058
    %v1099 = vunpack.c.l.b16 %v1059
    %v1100 = vunpack.c.l.b16 %v1060
    %v1101 = vunpack.c.l.b16 %v1061
    %v1102 = vunpack.c.l.b16 %v1062
    %v1103 = vunpack.c.l.b16 %v1063
    %v1104 = vunpack.c.l.b16 %v1064
    %v1105 = vunpack.c.l.b16 %v1065
    %v1106 = vunpack.c.l.b16 %v1066
    %v1107 = vunpack.c.l.b16 %v1067
    %v1108 = vunpack.c.l.b16 %v1068
    %v1109 = vunpack.c.l.b16 %v1069
    %v1110 = vpack.c.b16 %v1095, %v1094
    %v1111 = vpack.c.b16 %v1097, %v1096
    %v1112 = vpack.c.b16 %v1099, %v1098
    %v1113 = vpack.c.b16 %v1101, %v1100
    %v1114 = vpack.c.b16 %v1103, %v1102
    %v1115 = vpack.c.b16 %v1105, %v1104
    %v1116 = vpack.c.b16 %v1107, %v1106
    %v1117 = vpack.c.b16 %v1109, %v1108
    %1126 = vmatprep.subr.bf16.mxu0 0
    %1127 = vmatpush1.bf16.msra.mxu0 %v1117
    %1128 = vmatprep.subr.bf16.mxu0 0
    %1129 = vmatpush1.bf16.msra.mxu0 %v1116
    %1130 = vmatprep.subr.bf16.mxu0 0
    %1131 = vmatpush1.bf16.msra.mxu0 %v1115
    %1132 = vmatprep.subr.bf16.mxu0 0
    %1133 = vmatpush1.bf16.msra.mxu0 %v1114
    %1134 = vmatprep.subr.bf16.mxu0 0
    %1135 = vmatpush1.bf16.msra.mxu0 %v1113
    %1136 = vmatprep.subr.bf16.mxu0 0
    %1137 = vmatpush1.bf16.msra.mxu0 %v1112
    %1138 = vmatprep.subr.bf16.mxu0 0
    %1139 = vmatpush1.bf16.msra.mxu0 %v1111
    %1140 = vmatprep.subr.bf16.mxu0 0
    %1141 = vmatpush1.bf16.msra.mxu0 %v1110
    %1142 = vmatprep.subr.bf16.mxu0 0
    %1143 = vmatpush2.bf16.msra.mxu0 0
    %1144 = vmatprep.subr.bf16.mxu0 0
    %1145 = vmatpush2.bf16.msra.mxu0 0
    %1146 = vmatprep.subr.bf16.mxu0 0
    %1147 = vmatpush2.bf16.msra.mxu0 0
    %1148 = vmatprep.subr.bf16.mxu0 0
    %1149 = vmatpush2.bf16.msra.mxu0 0
    %1150 = vmatprep.subr.bf16.mxu0 0
    %1151 = vmatpush2.bf16.msra.mxu0 0
    %1152 = vmatprep.subr.bf16.mxu0 0
    %1153 = vmatpush2.bf16.msra.mxu0 0
    %1154 = vmatprep.subr.bf16.mxu0 0
    %1155 = vmatpush2.bf16.msra.mxu0 0
    %1156 = vmatprep.subr.bf16.mxu0 0
    %1157 = vmatpush2.bf16.msra.mxu0 0
    %1158 = vmatprep.mubr.bf16.mxu0 0
    %1159 = vmatmul.mubr.bf16.gmra.mxu0 %v1052
    %v1160 = vpop.f32.mrf.mxu0
    %v1161 = vadd.f32 %v1076, %v1160
    %v1162 = vpop.f32.mrf.mxu0
    %v1163 = vpop.f32.mrf.mxu0
    %v1164 = vpop.f32.mrf.mxu0
    %1165 = vdwg.mxu0
    %v1166 = vadd.f32 %v934, %v1161
    %v1167 = vpack.c.bf16 %v1166, %v1166
    %s1168 = scalar_lea.vmem [#allocation2], 576
    %v1169 = vld [vmem:[%s1168] sm:$0xf]
    %v1170 = vld [vmem:[%s1168 + $0x4] sm:$0xf]
    %v1171 = vld [vmem:[%s1168 + $0x8] sm:$0xf]
    %v1172 = vld [vmem:[%s1168 + $0xc] sm:$0xf]
    %v1173 = vld [vmem:[%s1168 + $0x10] sm:$0xf]
    %v1174 = vld [vmem:[%s1168 + $0x14] sm:$0xf]
    %v1175 = vld [vmem:[%s1168 + $0x18] sm:$0xf]
    %v1176 = vld [vmem:[%s1168 + $0x1c] sm:$0xf]
    %v1177 = vld [vmem:[%s1168 + $0x20] sm:$0xf]
    %v1178 = vld [vmem:[%s1168 + $0x24] sm:$0xf]
    %v1179 = vld [vmem:[%s1168 + $0x28] sm:$0xf]
    %v1180 = vld [vmem:[%s1168 + $0x2c] sm:$0xf]
    %v1181 = vld [vmem:[%s1168 + $0x30] sm:$0xf]
    %v1182 = vld [vmem:[%s1168 + $0x34] sm:$0xf]
    %v1183 = vld [vmem:[%s1168 + $0x38] sm:$0xf]
    %v1184 = vld [vmem:[%s1168 + $0x3c] sm:$0xf]
    %s1185 = scalar_lea.vmem %s5, 9
    %v1186 = vld [vmem:[%s1185] sm:$0x1]
    %v1188 = vlaneseq
    %v1189 = vshrl.u32 %v1188, 7
    %v1190 = vsub.s32 0, %v1189
    %v1191 = vrot.slane %v1186, %v1190
    %v1209 = vunpack.c.l.b16 %v1169
    %v1210 = vunpack.c.l.b16 %v1170
    %v1211 = vunpack.c.l.b16 %v1171
    %v1212 = vunpack.c.l.b16 %v1172
    %v1213 = vunpack.c.l.b16 %v1173
    %v1214 = vunpack.c.l.b16 %v1174
    %v1215 = vunpack.c.l.b16 %v1175
    %v1216 = vunpack.c.l.b16 %v1176
    %v1217 = vunpack.c.l.b16 %v1177
    %v1218 = vunpack.c.l.b16 %v1178
    %v1219 = vunpack.c.l.b16 %v1179
    %v1220 = vunpack.c.l.b16 %v1180
    %v1221 = vunpack.c.l.b16 %v1181
    %v1222 = vunpack.c.l.b16 %v1182
    %v1223 = vunpack.c.l.b16 %v1183
    %v1224 = vunpack.c.l.b16 %v1184
    %v1225 = vpack.c.b16 %v1210, %v1209
    %v1226 = vpack.c.b16 %v1212, %v1211
    %v1227 = vpack.c.b16 %v1214, %v1213
    %v1228 = vpack.c.b16 %v1216, %v1215
    %v1229 = vpack.c.b16 %v1218, %v1217
    %v1230 = vpack.c.b16 %v1220, %v1219
    %v1231 = vpack.c.b16 %v1222, %v1221
    %v1232 = vpack.c.b16 %v1224, %v1223
    %1241 = vmatprep.subr.bf16.mxu0 0
    %1242 = vmatpush1.bf16.msra.mxu0 %v1232
    %1243 = vmatprep.subr.bf16.mxu0 0
    %1244 = vmatpush1.bf16.msra.mxu0 %v1231
    %1245 = vmatprep.subr.bf16.mxu0 0
    %1246 = vmatpush1.bf16.msra.mxu0 %v1230
    %1247 = vmatprep.subr.bf16.mxu0 0
    %1248 = vmatpush1.bf16.msra.mxu0 %v1229
    %1249 = vmatprep.subr.bf16.mxu0 0
    %1250 = vmatpush1.bf16.msra.mxu0 %v1228
    %1251 = vmatprep.subr.bf16.mxu0 0
    %1252 = vmatpush1.bf16.msra.mxu0 %v1227
    %1253 = vmatprep.subr.bf16.mxu0 0
    %1254 = vmatpush1.bf16.msra.mxu0 %v1226
    %1255 = vmatprep.subr.bf16.mxu0 0
    %1256 = vmatpush1.bf16.msra.mxu0 %v1225
    %1257 = vmatprep.subr.bf16.mxu0 0
    %1258 = vmatpush2.bf16.msra.mxu0 0
    %1259 = vmatprep.subr.bf16.mxu0 0
    %1260 = vmatpush2.bf16.msra.mxu0 0
    %1261 = vmatprep.subr.bf16.mxu0 0
    %1262 = vmatpush2.bf16.msra.mxu0 0
    %1263 = vmatprep.subr.bf16.mxu0 0
    %1264 = vmatpush2.bf16.msra.mxu0 0
    %1265 = vmatprep.subr.bf16.mxu0 0
    %1266 = vmatpush2.bf16.msra.mxu0 0
    %1267 = vmatprep.subr.bf16.mxu0 0
    %1268 = vmatpush2.bf16.msra.mxu0 0
    %1269 = vmatprep.subr.bf16.mxu0 0
    %1270 = vmatpush2.bf16.msra.mxu0 0
    %1271 = vmatprep.subr.bf16.mxu0 0
    %1272 = vmatpush2.bf16.msra.mxu0 0
    %1273 = vmatprep.mubr.bf16.mxu0 0
    %1274 = vmatmul.mubr.bf16.gmra.mxu0 %v1167
    %v1275 = vpop.f32.mrf.mxu0
    %v1276 = vadd.f32 %v1191, %v1275
    %v1277 = vpop.f32.mrf.mxu0
    %v1278 = vpop.f32.mrf.mxu0
    %v1279 = vpop.f32.mrf.mxu0
    %1280 = vdwg.mxu0
    %vm1281 = vcmp.ge.f32.partialorder %v1276, 0.0
    %v1282 = vmul.f32 %v1276, 0.0025
    %v1283 = vsel %vm1281, %v1276, %v1282
    %v1284 = vpack.c.bf16 %v1283, %v1283
    %s1285 = scalar_lea.vmem [#allocation2], 640
    %v1286 = vld [vmem:[%s1285] sm:$0xf]
    %v1287 = vld [vmem:[%s1285 + $0x4] sm:$0xf]
    %v1288 = vld [vmem:[%s1285 + $0x8] sm:$0xf]
    %v1289 = vld [vmem:[%s1285 + $0xc] sm:$0xf]
    %v1290 = vld [vmem:[%s1285 + $0x10] sm:$0xf]
    %v1291 = vld [vmem:[%s1285 + $0x14] sm:$0xf]
    %v1292 = vld [vmem:[%s1285 + $0x18] sm:$0xf]
    %v1293 = vld [vmem:[%s1285 + $0x1c] sm:$0xf]
    %v1294 = vld [vmem:[%s1285 + $0x20] sm:$0xf]
    %v1295 = vld [vmem:[%s1285 + $0x24] sm:$0xf]
    %v1296 = vld [vmem:[%s1285 + $0x28] sm:$0xf]
    %v1297 = vld [vmem:[%s1285 + $0x2c] sm:$0xf]
    %v1298 = vld [vmem:[%s1285 + $0x30] sm:$0xf]
    %v1299 = vld [vmem:[%s1285 + $0x34] sm:$0xf]
    %v1300 = vld [vmem:[%s1285 + $0x38] sm:$0xf]
    %v1301 = vld [vmem:[%s1285 + $0x3c] sm:$0xf]
    %s1302 = scalar_lea.vmem %s5, 10
    %v1303 = vld [vmem:[%s1302] sm:$0x1]
    %v1305 = vlaneseq
    %v1306 = vshrl.u32 %v1305, 7
    %v1307 = vsub.s32 0, %v1306
    %v1308 = vrot.slane %v1303, %v1307
    %v1326 = vunpack.c.l.b16 %v1286
    %v1327 = vunpack.c.l.b16 %v1287
    %v1328 = vunpack.c.l.b16 %v1288
    %v1329 = vunpack.c.l.b16 %v1289
    %v1330 = vunpack.c.l.b16 %v1290
    %v1331 = vunpack.c.l.b16 %v1291
    %v1332 = vunpack.c.l.b16 %v1292
    %v1333 = vunpack.c.l.b16 %v1293
    %v1334 = vunpack.c.l.b16 %v1294
    %v1335 = vunpack.c.l.b16 %v1295
    %v1336 = vunpack.c.l.b16 %v1296
    %v1337 = vunpack.c.l.b16 %v1297
    %v1338 = vunpack.c.l.b16 %v1298
    %v1339 = vunpack.c.l.b16 %v1299
    %v1340 = vunpack.c.l.b16 %v1300
    %v1341 = vunpack.c.l.b16 %v1301
    %v1342 = vpack.c.b16 %v1327, %v1326
    %v1343 = vpack.c.b16 %v1329, %v1328
    %v1344 = vpack.c.b16 %v1331, %v1330
    %v1345 = vpack.c.b16 %v1333, %v1332
    %v1346 = vpack.c.b16 %v1335, %v1334
    %v1347 = vpack.c.b16 %v1337, %v1336
    %v1348 = vpack.c.b16 %v1339, %v1338
    %v1349 = vpack.c.b16 %v1341, %v1340
    %1358 = vmatprep.subr.bf16.mxu0 0
    %1359 = vmatpush1.bf16.msra.mxu0 %v1349
    %1360 = vmatprep.subr.bf16.mxu0 0
    %1361 = vmatpush1.bf16.msra.mxu0 %v1348
    %1362 = vmatprep.subr.bf16.mxu0 0
    %1363 = vmatpush1.bf16.msra.mxu0 %v1347
    %1364 = vmatprep.subr.bf16.mxu0 0
    %1365 = vmatpush1.bf16.msra.mxu0 %v1346
    %1366 = vmatprep.subr.bf16.mxu0 0
    %1367 = vmatpush1.bf16.msra.mxu0 %v1345
    %1368 = vmatprep.subr.bf16.mxu0 0
    %1369 = vmatpush1.bf16.msra.mxu0 %v1344
    %1370 = vmatprep.subr.bf16.mxu0 0
    %1371 = vmatpush1.bf16.msra.mxu0 %v1343
    %1372 = vmatprep.subr.bf16.mxu0 0
    %1373 = vmatpush1.bf16.msra.mxu0 %v1342
    %1374 = vmatprep.subr.bf16.mxu0 0
    %1375 = vmatpush2.bf16.msra.mxu0 0
    %1376 = vmatprep.subr.bf16.mxu0 0
    %1377 = vmatpush2.bf16.msra.mxu0 0
    %1378 = vmatprep.subr.bf16.mxu0 0
    %1379 = vmatpush2.bf16.msra.mxu0 0
    %1380 = vmatprep.subr.bf16.mxu0 0
    %1381 = vmatpush2.bf16.msra.mxu0 0
    %1382 = vmatprep.subr.bf16.mxu0 0
    %1383 = vmatpush2.bf16.msra.mxu0 0
    %1384 = vmatprep.subr.bf16.mxu0 0
    %1385 = vmatpush2.bf16.msra.mxu0 0
    %1386 = vmatprep.subr.bf16.mxu0 0
    %1387 = vmatpush2.bf16.msra.mxu0 0
    %1388 = vmatprep.subr.bf16.mxu0 0
    %1389 = vmatpush2.bf16.msra.mxu0 0
    %1390 = vmatprep.mubr.bf16.mxu0 0
    %1391 = vmatmul.mubr.bf16.gmra.mxu0 %v1284
    %v1392 = vpop.f32.mrf.mxu0
    %v1393 = vadd.f32 %v1308, %v1392
    %v1394 = vpop.f32.mrf.mxu0
    %v1395 = vpop.f32.mrf.mxu0
    %v1396 = vpop.f32.mrf.mxu0
    %1397 = vdwg.mxu0
    %v1398 = vadd.f32 %v1166, %v1393
    %v1399 = vpack.c.bf16 %v1398, %v1398
    %v1401 = vlaneseq
    %v1402 = vshrl.u32 %v1401, 7
    %v1403 = vsub.s32 0, %v1402
    %v1404 = vrot.slane %v63, %v1403
    %v1422 = vunpack.c.l.b16 %v46
    %v1423 = vunpack.c.l.b16 %v47
    %v1424 = vunpack.c.l.b16 %v48
    %v1425 = vunpack.c.l.b16 %v49
    %v1426 = vunpack.c.l.b16 %v50
    %v1427 = vunpack.c.l.b16 %v51
    %v1428 = vunpack.c.l.b16 %v52
    %v1429 = vunpack.c.l.b16 %v53
    %v1430 = vunpack.c.l.b16 %v54
    %v1431 = vunpack.c.l.b16 %v55
    %v1432 = vunpack.c.l.b16 %v56
    %v1433 = vunpack.c.l.b16 %v57
    %v1434 = vunpack.c.l.b16 %v58
    %v1435 = vunpack.c.l.b16 %v59
    %v1436 = vunpack.c.l.b16 %v60
    %v1437 = vunpack.c.l.b16 %v61
    %v1438 = vpack.c.b16 %v1423, %v1422
    %v1439 = vpack.c.b16 %v1425, %v1424
    %v1440 = vpack.c.b16 %v1427, %v1426
    %v1441 = vpack.c.b16 %v1429, %v1428
    %v1442 = vpack.c.b16 %v1431, %v1430
    %v1443 = vpack.c.b16 %v1433, %v1432
    %v1444 = vpack.c.b16 %v1435, %v1434
    %v1445 = vpack.c.b16 %v1437, %v1436
    %1454 = vmatprep.subr.bf16.mxu0 0
    %1455 = vmatpush1.bf16.msra.mxu0 %v1445
    %1456 = vmatprep.subr.bf16.mxu0 0
    %1457 = vmatpush1.bf16.msra.mxu0 %v1444
    %1458 = vmatprep.subr.bf16.mxu0 0
    %1459 = vmatpush1.bf16.msra.mxu0 %v1443
    %1460 = vmatprep.subr.bf16.mxu0 0
    %1461 = vmatpush1.bf16.msra.mxu0 %v1442
    %1462 = vmatprep.subr.bf16.mxu0 0
    %1463 = vmatpush1.bf16.msra.mxu0 %v1441
    %1464 = vmatprep.subr.bf16.mxu0 0
    %1465 = vmatpush1.bf16.msra.mxu0 %v1440
    %1466 = vmatprep.subr.bf16.mxu0 0
    %1467 = vmatpush1.bf16.msra.mxu0 %v1439
    %1468 = vmatprep.subr.bf16.mxu0 0
    %1469 = vmatpush1.bf16.msra.mxu0 %v1438
    %1470 = vmatprep.subr.bf16.mxu0 0
    %1471 = vmatpush2.bf16.msra.mxu0 0
    %1472 = vmatprep.subr.bf16.mxu0 0
    %1473 = vmatpush2.bf16.msra.mxu0 0
    %1474 = vmatprep.subr.bf16.mxu0 0
    %1475 = vmatpush2.bf16.msra.mxu0 0
    %1476 = vmatprep.subr.bf16.mxu0 0
    %1477 = vmatpush2.bf16.msra.mxu0 0
    %1478 = vmatprep.subr.bf16.mxu0 0
    %1479 = vmatpush2.bf16.msra.mxu0 0
    %1480 = vmatprep.subr.bf16.mxu0 0
    %1481 = vmatpush2.bf16.msra.mxu0 0
    %1482 = vmatprep.subr.bf16.mxu0 0
    %1483 = vmatpush2.bf16.msra.mxu0 0
    %1484 = vmatprep.subr.bf16.mxu0 0
    %1485 = vmatpush2.bf16.msra.mxu0 0
    %1486 = vmatprep.mubr.bf16.mxu0 0
    %1487 = vmatmul.mubr.bf16.gmra.mxu0 %v1399
    %v1488 = vpop.f32.mrf.mxu0
    %v1489 = vadd.f32 %v1404, %v1488
    %v1490 = vpop.f32.mrf.mxu0
    %v1491 = vpop.f32.mrf.mxu0
    %v1492 = vpop.f32.mrf.mxu0
    %1493 = vdwg.mxu0
    %vm1494 = vcmp.ge.f32.partialorder %v1489, 0.0
    %v1495 = vmul.f32 %v1489, 0.0025
    %v1496 = vsel %vm1494, %v1489, %v1495
    %vm1497 = vcmask 7168
    %1498 = vst.msk [vmem:[%s7] sm:$0xff] %vm1497, %v817
    %1499 = vst.msk [vmem:[#allocation5] sm:$0xff] %vm78, %v1496
    // Predicated region
    $region34: #{ann_forward.1} parent=1 // pred_check
      _
    $region35: #{ann_forward.1} parent=1 // pred_check_branch
      %1501 = sbr.rel (0) target = $region37
    $region36: #{ann_forward.1} parent=1 // pred_region
      _
    $region37: #{ann_forward.1} parent=1 // pred_fallthru
      _
    // Predicated region
    $region38: #{ann_forward.1} parent=1 // pred_check
      _
    $region39: #{ann_forward.1} parent=1 // pred_check_branch
      %1503 = sbr.rel (0) target = $region41
    $region40: #{ann_forward.1} parent=1 // pred_region
      %s1505 = ssub.s32 128, 128
      %1506 = vsyncadd [#allocation4], %s1505
      %s1508 = sshll.u32 [#allocation5], 4
      %s1509 = int_to_ptr.vmem [resolvable:$true] %s1508
      %1511 = dma.vmem_to_hbm [thread:$0]  %s1509, 128, %s8, [#allocation4]
    $region41: #{ann_forward.1} parent=1 // pred_fallthru
      _
    // Predicated region
    $region42: #{ann_forward.1} parent=1 // pred_check
      _
    $region43: #{ann_forward.1} parent=1 // pred_check_branch
      %1513 = sbr.rel (0) target = $region45
    $region44: #{ann_forward.1} parent=1 // pred_region
      _
    $region45: #{ann_forward.1} parent=1 // pred_fallthru
      _
    // Predicated region
    $region46: #{ann_forward.1} parent=1 // pred_check
      _
    $region47: #{ann_forward.1} parent=1 // pred_check_branch
      %1515 = sbr.rel (0) target = $region49
    $region48: #{ann_forward.1} parent=1 // pred_region
      %1516 = dma.done [#allocation4], 128
    $region49: #{ann_forward.1} parent=1 // pred_fallthru
      _
    %1517 = vsyncpa [#allocation3], 1
    %1518 = vsyncpa [#allocation4], 1

</llo_original>
